<compile_context>
chip_gen: v7x
topology: tpu7x:2x2x1
jax: 0.10.0
libtpu: 0.0.40
codegen_flags: <defaults>
</compile_context>

<pallas_src>
import jax
import jax.numpy as jnp
import numpy as np
from jax.experimental import pallas as pl
from jax.experimental.pallas import tpu as pltpu

_LANE = 128
_SUB = 16   # pad W to a multiple of 16: bf16 tiles are (16,128), keeps the
            # (rows, W, K) -> (rows*W, K) im2col reshapes layout-preserving.


def _round_up(v, m):
    return (v + m - 1) // m * m


def _cdiv(a, b):
    return -(-a // b)


def _vmem_capacity_bytes():
    """Generation-aware VMEM capacity (v5e/v6e: 128 MiB, v7x: 64 MiB)."""
    try:
        info = pltpu.get_tpu_info()
        for name in ("vmem_capacity_bytes", "vmem_size_bytes", "vmem_bytes"):
            v = getattr(info, name, None)
            if v:
                return int(v)
    except Exception:
        pass
    try:
        kind = jax.devices()[0].device_kind.lower()
        if "v7" in kind:
            return 64 * 1024 * 1024
    except Exception:
        pass
    return 128 * 1024 * 1024


def _pick_tile_rows(h_out, w_p, cp, requested, vmem_cap):
    """Pick (TH, num_row_tiles) with balanced (ragged-safe) row tiles."""
    if requested is not None:
        th = max(1, min(int(requested), h_out))
    else:
        # Working-set budget per generation (stay inside the scoped-VMEM
        # limit: v7x has 64 MiB physical, v5e/v6e 128 MiB).
        budget = (28 if vmem_cap >= 96 * 1024 * 1024 else 14) * 1024 * 1024
        # Conservative per-output-row accounting (bytes / row / W / cp):
        #   8  f32 double-buffered halo window
        #  12  bf16 kw-shifted copies (both convs)
        #   6  bf16 per-kh im2col patch
        #  16  f32 conv accumulators + h1 + residual temporaries
        #   8  f32 double-buffered output block            -> ~80 total (padded)
        bytes_per_row = w_p * cp * 80
        fixed = 4 * w_p * cp * 16                  # 4-row halo share
        fixed += 2 * 2 * 9 * cp * cp * 2           # double-buffered bf16 weights
        th = max(1, (budget - fixed) // bytes_per_row)
        th = int(min(th, h_out))
    # Balance the tiles so the zero-padded tail is at most num_r - 1 rows
    # (no silent TH collapse toward 1 for awkward / prime H-4).
    num_r = _cdiv(h_out, th)
    th = _cdiv(h_out, num_r)
    return int(th), int(num_r)


def _make_kernel(th, w_p, cp, compute_dtype):
    tin = th + 4          # input rows per tile (4-row halo)
    h1_rows = th + 2      # rows after the first VALID conv
    w_store = w_p - 4     # stored width (wrap-around columns cropped)

    def shifted3(src_f32):
        # kw column shifts via XLU roll.  The roll stays on the f32 tensor
        # (32-bit sublane rotate is the reliably-supported Mosaic path; packed
        # bf16 sublane rolls by odd shifts are not), but every shifted copy is
        # cast to bf16 immediately so the im2col / MXU path is half-width.
        return (
            src_f32.astype(compute_dtype),
            pltpu.roll(src_f32, shift=w_p - 1, axis=1).astype(compute_dtype),
            pltpu.roll(src_f32, shift=w_p - 2, axis=1).astype(compute_dtype),
        )

    def conv3x3_valid(shifted, w_ref, nrows):
        # Per-kh fused-tap matmuls: K = 3*cp (kw concat only), sequential f32
        # accumulation so v7x can use MRB in-place accumulation.  Columns
        # >= w_p - 2 wrap around and are cropped at the store / wrapper.
        acc = None
        for kh in range(3):
            patch = jnp.concatenate(
                [shifted[kw][kh:kh + nrows] for kw in range(3)], axis=-1)
            patch = patch.reshape(nrows * w_p, 3 * cp)
            part = jnp.dot(patch, w_ref[kh],
                           preferred_element_type=jnp.float32)
            acc = part if acc is None else acc + part
        return acc.reshape(nrows, w_p, cp)

    def kernel(x_hbm, w1_ref, b1_ref, w2_ref, b2_ref, o_ref, xbuf, sem):
        # x_hbm : (N, H_p, W_p, cp) f32 in HBM (manual halo DMA)
        # w*_ref: (3, 3*cp, cp) bf16 per-kh fused-tap weights (VMEM resident)
        # b*_ref: (1, cp) f32 biases
        # o_ref : (1, th, W_p-4, cp) f32 output block (auto-pipelined)
        # xbuf  : (2, th+4, W_p, cp) f32 double-buffered halo window
        # sem   : (2,) DMA semaphores
        n = pl.program_id(0)
        r = pl.program_id(1)
        num_r = pl.num_programs(1)
        slot = r % 2

        def window_copy(row_tile, buf_slot):
            # Single descriptor builder used for BOTH start and wait so the
            # wait always matches the copy it pairs with (same image, same
            # row offset, same destination slot, same semaphore).
            return pltpu.make_async_copy(
                x_hbm.at[n, pl.ds(row_tile * th, tin)],
                xbuf.at[buf_slot],
                sem.at[buf_slot])

        # Prime the per-image DMA chain on its first row tile.
        @pl.when(r == 0)
        def _():
            window_copy(0, slot).start()

        # Wait for this step's window (started above if r == 0, otherwise by
        # the previous step's prefetch into this slot).
        window_copy(r, slot).wait()

        # Prefetch the next row tile of the same image while computing.
        @pl.when(r + 1 < num_r)
        def _():
            window_copy(r + 1, 1 - slot).start()

        x = xbuf[slot]                                   # (tin, W_p, cp) f32

        # conv1 + bias + ReLU (bias / ReLU stay f32).
        sx = shifted3(x)
        h1 = conv3x3_valid(sx, w1_ref, h1_rows) + b1_ref[...]
        h1 = jnp.maximum(h1, 0.0)

        # conv2 + bias (f32 accumulation).
        sh = shifted3(h1)
        y2 = conv3x3_valid(sh, w2_ref, th) + b2_ref[...]

        # Residual: center-cropped input window, full f32 precision.
        res = pltpu.roll(x[2:2 + th], shift=w_p - 2, axis=1)

        out_full = y2 + res                              # (th, W_p, cp) f32
        o_ref[0] = out_full[:, :w_store, :].astype(o_ref.dtype)

    return kernel


def res_sequential_center_nhwc(x_nhwc, w1_hwio, b1, w2_hwio, b2,
                               *, tile_rows=None, compute_dtype=jnp.bfloat16):
    """ResSequentialCenter forward on NHWC activations / HWIO conv weights."""
    n, h, w, c = x_nhwc.shape
    assert h >= 5 and w >= 5, "two VALID 3x3 convs need spatial dims >= 5"
    h_out, w_out = h - 4, w - 4

    vmem_cap = _vmem_capacity_bytes()

    # Channels padded to the 128-lane width (no-op for realistic C=128 blocks);
    # W padded to a multiple of 16 so the bf16 im2col reshapes stay aligned
    # (the extra zero columns / rows are cropped after the kernel).
    cp = _round_up(c, _LANE)
    w_p = _round_up(w, _SUB)

    th, num_r = _pick_tile_rows(h_out, w_p, cp, tile_rows, vmem_cap)
    h_out_p = th * num_r               # ragged tail handled by zero-pad rows
    h_p = h_out_p + 4

    pad_c, pad_w, pad_h = cp - c, w_p - w, h_p - h

    x_f32 = x_nhwc.astype(jnp.float32)            # residual path stays f32
    if pad_c or pad_w or pad_h:
        x_f32 = jnp.pad(x_f32, ((0, 0), (0, pad_h), (0, pad_w), (0, pad_c)))
    if pad_c:
        w1_hwio = jnp.pad(w1_hwio, ((0, 0), (0, 0), (0, pad_c), (0, pad_c)))
        w2_hwio = jnp.pad(w2_hwio, ((0, 0), (0, 0), (0, pad_c), (0, pad_c)))
        b1 = jnp.pad(b1, (0, pad_c))
        b2 = jnp.pad(b2, (0, pad_c))

    # Per-kh fused-tap weights: HWIO (3,3,cp,cp) -> (3, 3*cp, cp); the
    # kw-major / cin-minor rows match the kernel's kw-concat patch order.
    w1_r = w1_hwio.reshape(3, 3 * cp, cp).astype(compute_dtype)
    w2_r = w2_hwio.reshape(3, 3 * cp, cp).astype(compute_dtype)
    b1_r = b1.reshape(1, cp).astype(jnp.float32)
    b2_r = b2.reshape(1, cp).astype(jnp.float32)

    kernel = _make_kernel(th, w_p, cp, compute_dtype)
    w_store = w_p - 4
    vmem_limit = int(min(vmem_cap * 3 // 4, 112 * 1024 * 1024))

    out = pl.pallas_call(
        kernel,
        out_shape=jax.ShapeDtypeStruct((n, h_out_p, w_store, cp), jnp.float32),
        grid_spec=pltpu.PrefetchScalarGridSpec(
            num_scalar_prefetch=0,
            grid=(n, num_r),
            in_specs=[
                pl.BlockSpec(memory_space=pl.ANY),            # x: manual DMA
                pl.BlockSpec((3, 3 * cp, cp), lambda i, r: (0, 0, 0)),
                pl.BlockSpec((1, cp), lambda i, r: (0, 0)),
                pl.BlockSpec((3, 3 * cp, cp), lambda i, r: (0, 0, 0)),
                pl.BlockSpec((1, cp), lambda i, r: (0, 0)),
            ],
            out_specs=pl.BlockSpec((1, th, w_store, cp),
                                   lambda i, r: (i, r, 0, 0)),
            scratch_shapes=[
                pltpu.VMEM((2, th + 4, w_p, cp), jnp.float32),  # halo dbl-buf
                pltpu.SemaphoreType.DMA((2,)),
            ],
        ),
        compiler_params=pltpu.CompilerParams(
            # Batch axis may shard across TensorCores (v7x megacore); the row
            # axis stays "arbitrary" so each image's halo-prefetch chain runs
            # its row tiles in order on one core.
            dimension_semantics=("parallel", "arbitrary"),
            vmem_limit_bytes=vmem_limit,
        ),
    )(x_f32, w1_r, b1_r, w2_r, b2_r)

    if (h_out_p, w_store, cp) != (h_out, w_out, c):
        out = out[:, :h_out, :w_out, :c]
    return out


def res_sequential_center(x_nchw, w1_hwio, b1, w2_hwio, b2,
                          *, tile_rows=None, compute_dtype=jnp.bfloat16):
    """PyTorch-layout entry point (NCHW activations, HWIO conv weights).

    The NCHW<->NHWC transposes are full HBM passes outside the kernel; keep
    the surrounding model channels-last and call res_sequential_center_nhwc
    to avoid them.
    """
    x_nhwc = jnp.transpose(x_nchw, (0, 2, 3, 1))
    out_nhwc = res_sequential_center_nhwc(
        x_nhwc, w1_hwio, b1, w2_hwio, b2,
        tile_rows=tile_rows, compute_dtype=compute_dtype)
    return jnp.transpose(out_nhwc, (0, 3, 1, 2))


def _reference(x_nchw, w1_hwio, b1, w2_hwio, b2, compute_dtype=jnp.bfloat16):
    """Pure-JAX reference (PyTorch Conv2d(pad=0) semantics) with the same
    operand-dtype policy as the kernel: conv operands in `compute_dtype`,
    f32 accumulation, f32 bias/ReLU/residual."""
    dn = ("NCHW", "OIHW", "NCHW")
    w1_oihw = jnp.transpose(w1_hwio, (3, 2, 0, 1)).astype(compute_dtype)
    w2_oihw = jnp.transpose(w2_hwio, (3, 2, 0, 1)).astype(compute_dtype)
    x = x_nchw.astype(jnp.float32)
    h = jax.lax.conv_general_dilated(
        x.astype(compute_dtype), w1_oihw, (1, 1), "VALID",
        dimension_numbers=dn, preferred_element_type=jnp.float32)
    h = jnp.maximum(h + b1.reshape(1, -1, 1, 1).astype(jnp.float32), 0.0)
    h = jax.lax.conv_general_dilated(
        h.astype(compute_dtype), w2_oihw, (1, 1), "VALID",
        dimension_numbers=dn, preferred_element_type=jnp.float32)
    h = h + b2.reshape(1, -1, 1, 1).astype(jnp.float32)
    return x[:, :, 2:-2, 2:-2] + h


if __name__ == "__main__":
    key = jax.random.PRNGKey(0)

    def run_case(nchw_shape, tile_rows):
        n_, c_, h_, w_ = nchw_shape
        kx, k1, k2, k3, k4 = jax.random.split(
            jax.random.fold_in(key, h_ * 1000 + w_), 5)
        x = jax.random.normal(kx, (n_, c_, h_, w_), jnp.float32)
        fan_in = c_ * 9
        bound = 1.0 / np.sqrt(fan_in)
        w1 = jax.random.uniform(k1, (3, 3, c_, c_), jnp.float32, -bound, bound)
        b1 = jax.random.uniform(k2, (c_,), jnp.float32, -bound, bound)
        w2 = jax.random.uniform(k3, (3, 3, c_, c_), jnp.float32, -bound, bound)
        b2 = jax.random.uniform(k4, (c_,), jnp.float32, -bound, bound)

        out = jax.block_until_ready(
            res_sequential_center(x, w1, b1, w2, b2, tile_rows=tile_rows))
        assert out.shape == (n_, c_, h_ - 4, w_ - 4), out.shape

        ref_bf16 = jax.block_until_ready(
            _reference(x, w1, b1, w2, b2, jnp.bfloat16))
        ref_f32 = jax.block_until_ready(
            _reference(x, w1, b1, w2, b2, jnp.float32))
        # Tight check vs. the dtype-mirrored reference (only summation order
        # differs), loose sanity check vs. full-f32 (bf16 operand rounding).
        assert np.allclose(np.asarray(out), np.asarray(ref_bf16),
                           atol=2e-3, rtol=2e-3), "mismatch vs bf16 reference"
        assert np.allclose(np.asarray(out), np.asarray(ref_f32),
                           atol=5e-2, rtol=5e-2), "mismatch vs f32 reference"

    # Multi-row-tile path: grid (2, 3), exercises the halo DMA chain + prefetch.
    run_case((2, 4, 16, 16), tile_rows=4)
    # Auto tile size (single row tile per image here).
    run_case((2, 4, 16, 16), tile_rows=None)
    # Ragged H (h_out=13 prime) + unaligned W + small C: exercises the
    # balanced-tile row padding, the W padding and the lane padding paths.
    run_case((1, 4, 17, 18), tile_rows=5)

    print("KERNEL_OK")
</pallas_src>

<mosaic_0001>
module attributes {stable_mosaic.version = 11 : i64} {
  func.func @kernel(%arg0: i32, %arg1: i32, %arg2: memref<2x16x16x128xf32, #tpu.memory_space<any>>, %arg3: memref<3x384x128xbf16, #tpu.memory_space<vmem>>, %arg4: memref<1x128xf32, #tpu.memory_space<vmem>>, %arg5: memref<3x384x128xbf16, #tpu.memory_space<vmem>>, %arg6: memref<1x128xf32, #tpu.memory_space<vmem>>, %arg7: memref<1x4x12x128xf32, #tpu.memory_space<vmem>>, %arg8: memref<2x8x16x128xf32, #tpu.memory_space<vmem>>, %arg9: memref<2x!tpu.dma_semaphore, #tpu.memory_space<semaphore_mem>>) attributes {dimension_semantics = [#tpu.dimension_semantics<parallel>, #tpu.dimension_semantics<arbitrary>], iteration_bounds = array<i64: 2, 3>, scalar_prefetch = 0 : i64, scratch_operands = 2 : i64, tpu.core_type = #tpu.core_type<tc>, window_params = [{}, {pipeline_mode = #tpu.pipeline_mode<synchronous>, transform_indices = @transform_1, window_bounds = array<i64: 3, 384, 128>}, {pipeline_mode = #tpu.pipeline_mode<synchronous>, transform_indices = @transform_2, window_bounds = array<i64: 1, 128>}, {pipeline_mode = #tpu.pipeline_mode<synchronous>, transform_indices = @transform_3, window_bounds = array<i64: 3, 384, 128>}, {pipeline_mode = #tpu.pipeline_mode<synchronous>, transform_indices = @transform_4, window_bounds = array<i64: 1, 128>}, {transform_indices = @transform_5, window_bounds = array<i64: 1, 4, 12, 128>}]} {
    %c2_i32 = arith.constant 2 : i32
    %c0_i32 = arith.constant 0 : i32
    %0 = arith.cmpi eq, %c2_i32, %c0_i32 : i32
    %c1_i32 = arith.constant 1 : i32
    %1 = arith.select %0, %c1_i32, %c2_i32 : i32
    %2 = arith.remsi %arg1, %1 : i32
    %c0_i32_0 = arith.constant 0 : i32
    %3 = arith.cmpi ne, %2, %c0_i32_0 : i32
    %c0_i32_1 = arith.constant 0 : i32
    %4 = arith.cmpi slt, %2, %c0_i32_1 : i32
    %c0_i32_2 = arith.constant 0 : i32
    %5 = arith.cmpi slt, %1, %c0_i32_2 : i32
    %6 = arith.xori %4, %5 : i1
    %7 = arith.andi %6, %3 : i1
    %8 = arith.addi %2, %1 : i32
    %9 = arith.select %7, %8, %2 : i32
    %c0_i32_3 = arith.constant 0 : i32
    %10 = arith.cmpi eq, %arg1, %c0_i32_3 : i32
    %11 = arith.extui %10 : i1 to i32
    %c0_i32_4 = arith.constant 0 : i32
    %12 = arith.cmpi ne, %11, %c0_i32_4 : i32
    scf.if %12 {
      %c0_i32_47 = arith.constant 0 : i32
      %c0_i32_48 = arith.constant 0 : i32
      %c0_i32_49 = arith.constant 0 : i32
      %108 = tpu.memref_slice %arg2[%arg0, %c0_i32_47, %c0_i32_48, %c0_i32_49] : memref<2x16x16x128xf32, #tpu.memory_space<any>> -> memref<1x8x16x128xf32, #tpu.memory_space<any>>
      %109 = tpu.memref_squeeze %108 : memref<1x8x16x128xf32, #tpu.memory_space<any>> -> memref<8x16x128xf32, #tpu.memory_space<any>>
      %c0_i32_50 = arith.constant 0 : i32
      %c0_i32_51 = arith.constant 0 : i32
      %c0_i32_52 = arith.constant 0 : i32
      %110 = tpu.memref_slice %arg8[%9, %c0_i32_50, %c0_i32_51, %c0_i32_52] : memref<2x8x16x128xf32, #tpu.memory_space<vmem>> -> memref<1x8x16x128xf32, #tpu.memory_space<vmem>>
      %111 = tpu.memref_squeeze %110 : memref<1x8x16x128xf32, #tpu.memory_space<vmem>> -> memref<8x16x128xf32, #tpu.memory_space<vmem>>
      %112 = tpu.memref_slice %arg9[%9] : memref<2x!tpu.dma_semaphore, #tpu.memory_space<semaphore_mem>> -> memref<1x!tpu.dma_semaphore, #tpu.memory_space<semaphore_mem>>
      %113 = tpu.memref_squeeze %112 : memref<1x!tpu.dma_semaphore, #tpu.memory_space<semaphore_mem>> -> memref<!tpu.dma_semaphore, #tpu.memory_space<semaphore_mem>>
      tpu.enqueue_dma source(%109 : memref<8x16x128xf32, #tpu.memory_space<any>>) target(%111 : memref<8x16x128xf32, #tpu.memory_space<vmem>>) target_semaphore(%113 : memref<!tpu.dma_semaphore, #tpu.memory_space<semaphore_mem>>)
    } else {
    }
    %c4_i32 = arith.constant 4 : i32
    %13 = arith.muli %arg1, %c4_i32 : i32
    %c0_i32_5 = arith.constant 0 : i32
    %c0_i32_6 = arith.constant 0 : i32
    %14 = tpu.memref_slice %arg2[%arg0, %13, %c0_i32_5, %c0_i32_6] : memref<2x16x16x128xf32, #tpu.memory_space<any>> -> memref<1x8x16x128xf32, #tpu.memory_space<any>>
    %15 = tpu.memref_squeeze %14 : memref<1x8x16x128xf32, #tpu.memory_space<any>> -> memref<8x16x128xf32, #tpu.memory_space<any>>
    %c0_i32_7 = arith.constant 0 : i32
    %c0_i32_8 = arith.constant 0 : i32
    %c0_i32_9 = arith.constant 0 : i32
    %16 = tpu.memref_slice %arg8[%9, %c0_i32_7, %c0_i32_8, %c0_i32_9] : memref<2x8x16x128xf32, #tpu.memory_space<vmem>> -> memref<1x8x16x128xf32, #tpu.memory_space<vmem>>
    %17 = tpu.memref_squeeze %16 : memref<1x8x16x128xf32, #tpu.memory_space<vmem>> -> memref<8x16x128xf32, #tpu.memory_space<vmem>>
    %18 = tpu.memref_slice %arg9[%9] : memref<2x!tpu.dma_semaphore, #tpu.memory_space<semaphore_mem>> -> memref<1x!tpu.dma_semaphore, #tpu.memory_space<semaphore_mem>>
    %19 = tpu.memref_squeeze %18 : memref<1x!tpu.dma_semaphore, #tpu.memory_space<semaphore_mem>> -> memref<!tpu.dma_semaphore, #tpu.memory_space<semaphore_mem>>
    tpu.wait_dma2 semaphore(%19 : memref<!tpu.dma_semaphore, #tpu.memory_space<semaphore_mem>>) src(%15 : memref<8x16x128xf32, #tpu.memory_space<any>>) dst(%17 : memref<8x16x128xf32, #tpu.memory_space<vmem>>)
    %c1_i32_10 = arith.constant 1 : i32
    %20 = arith.addi %arg1, %c1_i32_10 : i32
    %c3_i32 = arith.constant 3 : i32
    %21 = arith.cmpi slt, %20, %c3_i32 : i32
    %22 = arith.extui %21 : i1 to i32
    %c0_i32_11 = arith.constant 0 : i32
    %23 = arith.cmpi ne, %22, %c0_i32_11 : i32
    scf.if %23 {
      %c1_i32_47 = arith.constant 1 : i32
      %108 = arith.addi %arg1, %c1_i32_47 : i32
      %c1_i32_48 = arith.constant 1 : i32
      %109 = arith.subi %c1_i32_48, %9 : i32
      %c4_i32_49 = arith.constant 4 : i32
      %110 = arith.muli %108, %c4_i32_49 : i32
      %c0_i32_50 = arith.constant 0 : i32
      %c0_i32_51 = arith.constant 0 : i32
      %111 = tpu.memref_slice %arg2[%arg0, %110, %c0_i32_50, %c0_i32_51] : memref<2x16x16x128xf32, #tpu.memory_space<any>> -> memref<1x8x16x128xf32, #tpu.memory_space<any>>
      %112 = tpu.memref_squeeze %111 : memref<1x8x16x128xf32, #tpu.memory_space<any>> -> memref<8x16x128xf32, #tpu.memory_space<any>>
      %c0_i32_52 = arith.constant 0 : i32
      %c0_i32_53 = arith.constant 0 : i32
      %c0_i32_54 = arith.constant 0 : i32
      %113 = tpu.memref_slice %arg8[%109, %c0_i32_52, %c0_i32_53, %c0_i32_54] : memref<2x8x16x128xf32, #tpu.memory_space<vmem>> -> memref<1x8x16x128xf32, #tpu.memory_space<vmem>>
      %114 = tpu.memref_squeeze %113 : memref<1x8x16x128xf32, #tpu.memory_space<vmem>> -> memref<8x16x128xf32, #tpu.memory_space<vmem>>
      %115 = tpu.memref_slice %arg9[%109] : memref<2x!tpu.dma_semaphore, #tpu.memory_space<semaphore_mem>> -> memref<1x!tpu.dma_semaphore, #tpu.memory_space<semaphore_mem>>
      %116 = tpu.memref_squeeze %115 : memref<1x!tpu.dma_semaphore, #tpu.memory_space<semaphore_mem>> -> memref<!tpu.dma_semaphore, #tpu.memory_space<semaphore_mem>>
      tpu.enqueue_dma source(%112 : memref<8x16x128xf32, #tpu.memory_space<any>>) target(%114 : memref<8x16x128xf32, #tpu.memory_space<vmem>>) target_semaphore(%116 : memref<!tpu.dma_semaphore, #tpu.memory_space<semaphore_mem>>)
    } else {
    }
    %24 = arith.index_cast %9 : i32 to index
    %c0 = arith.constant 0 : index
    %c0_12 = arith.constant 0 : index
    %c0_13 = arith.constant 0 : index
    %25 = vector.load %arg8[%24, %c0, %c0_12, %c0_13] : memref<2x8x16x128xf32, #tpu.memory_space<vmem>>, vector<1x8x16x128xf32>
    %26 = vector.shape_cast %25 : vector<1x8x16x128xf32> to vector<8x16x128xf32>
    %27 = arith.truncf %26 : vector<8x16x128xf32> to vector<8x16x128xbf16>
    %c15_i32 = arith.constant 15 : i32
    %28 = tpu.dynamic_rotate %26 by %c15_i32 dim 1 : vector<8x16x128xf32>, i32 -> vector<8x16x128xf32>
    %29 = arith.truncf %28 : vector<8x16x128xf32> to vector<8x16x128xbf16>
    %c14_i32 = arith.constant 14 : i32
    %30 = tpu.dynamic_rotate %26 by %c14_i32 dim 1 : vector<8x16x128xf32>, i32 -> vector<8x16x128xf32>
    %31 = arith.truncf %30 : vector<8x16x128xf32> to vector<8x16x128xbf16>
    %32 = vector.extract_strided_slice %27 {offsets = [0, 0, 0], sizes = [6, 16, 128], strides = [1, 1, 1]} : vector<8x16x128xbf16> to vector<6x16x128xbf16>
    %33 = vector.extract_strided_slice %29 {offsets = [0, 0, 0], sizes = [6, 16, 128], strides = [1, 1, 1]} : vector<8x16x128xbf16> to vector<6x16x128xbf16>
    %34 = vector.extract_strided_slice %31 {offsets = [0, 0, 0], sizes = [6, 16, 128], strides = [1, 1, 1]} : vector<8x16x128xbf16> to vector<6x16x128xbf16>
    %35 = tpu.concatenate %32, %33, %34 in 2 : vector<6x16x128xbf16>, vector<6x16x128xbf16>, vector<6x16x128xbf16> -> vector<6x16x384xbf16>
    %36 = vector.shape_cast %35 : vector<6x16x384xbf16> to vector<96x384xbf16>
    %c0_14 = arith.constant 0 : index
    %c0_15 = arith.constant 0 : index
    %c0_16 = arith.constant 0 : index
    %37 = vector.load %arg3[%c0_14, %c0_15, %c0_16] : memref<3x384x128xbf16, #tpu.memory_space<vmem>>, vector<1x384x128xbf16>
    %38 = vector.shape_cast %37 : vector<1x384x128xbf16> to vector<384x128xbf16>
    %cst = arith.constant dense<0.000000e+00> : vector<96x128xf32>
    %39 = tpu.matmul %36, %38, %cst {dimension_numbers = #tpu.dot_dimension_numbers<[1], [0], [0], [1], [0, 0, 1, 1], [], []>} : vector<96x384xbf16>, vector<384x128xbf16>, vector<96x128xf32> -> vector<96x128xf32>
    %40 = vector.extract_strided_slice %27 {offsets = [1, 0, 0], sizes = [6, 16, 128], strides = [1, 1, 1]} : vector<8x16x128xbf16> to vector<6x16x128xbf16>
    %41 = vector.extract_strided_slice %29 {offsets = [1, 0, 0], sizes = [6, 16, 128], strides = [1, 1, 1]} : vector<8x16x128xbf16> to vector<6x16x128xbf16>
    %42 = vector.extract_strided_slice %31 {offsets = [1, 0, 0], sizes = [6, 16, 128], strides = [1, 1, 1]} : vector<8x16x128xbf16> to vector<6x16x128xbf16>
    %43 = tpu.concatenate %40, %41, %42 in 2 : vector<6x16x128xbf16>, vector<6x16x128xbf16>, vector<6x16x128xbf16> -> vector<6x16x384xbf16>
    %44 = vector.shape_cast %43 : vector<6x16x384xbf16> to vector<96x384xbf16>
    %c1 = arith.constant 1 : index
    %c0_17 = arith.constant 0 : index
    %c0_18 = arith.constant 0 : index
    %45 = vector.load %arg3[%c1, %c0_17, %c0_18] : memref<3x384x128xbf16, #tpu.memory_space<vmem>>, vector<1x384x128xbf16>
    %46 = vector.shape_cast %45 : vector<1x384x128xbf16> to vector<384x128xbf16>
    %cst_19 = arith.constant dense<0.000000e+00> : vector<96x128xf32>
    %47 = tpu.matmul %44, %46, %cst_19 {dimension_numbers = #tpu.dot_dimension_numbers<[1], [0], [0], [1], [0, 0, 1, 1], [], []>} : vector<96x384xbf16>, vector<384x128xbf16>, vector<96x128xf32> -> vector<96x128xf32>
    %48 = arith.addf %39, %47 : vector<96x128xf32>
    %49 = vector.extract_strided_slice %27 {offsets = [2, 0, 0], sizes = [6, 16, 128], strides = [1, 1, 1]} : vector<8x16x128xbf16> to vector<6x16x128xbf16>
    %50 = vector.extract_strided_slice %29 {offsets = [2, 0, 0], sizes = [6, 16, 128], strides = [1, 1, 1]} : vector<8x16x128xbf16> to vector<6x16x128xbf16>
    %51 = vector.extract_strided_slice %31 {offsets = [2, 0, 0], sizes = [6, 16, 128], strides = [1, 1, 1]} : vector<8x16x128xbf16> to vector<6x16x128xbf16>
    %52 = tpu.concatenate %49, %50, %51 in 2 : vector<6x16x128xbf16>, vector<6x16x128xbf16>, vector<6x16x128xbf16> -> vector<6x16x384xbf16>
    %53 = vector.shape_cast %52 : vector<6x16x384xbf16> to vector<96x384xbf16>
    %c2 = arith.constant 2 : index
    %c0_20 = arith.constant 0 : index
    %c0_21 = arith.constant 0 : index
    %54 = vector.load %arg3[%c2, %c0_20, %c0_21] : memref<3x384x128xbf16, #tpu.memory_space<vmem>>, vector<1x384x128xbf16>
    %55 = vector.shape_cast %54 : vector<1x384x128xbf16> to vector<384x128xbf16>
    %cst_22 = arith.constant dense<0.000000e+00> : vector<96x128xf32>
    %56 = tpu.matmul %53, %55, %cst_22 {dimension_numbers = #tpu.dot_dimension_numbers<[1], [0], [0], [1], [0, 0, 1, 1], [], []>} : vector<96x384xbf16>, vector<384x128xbf16>, vector<96x128xf32> -> vector<96x128xf32>
    %57 = arith.addf %48, %56 : vector<96x128xf32>
    %58 = vector.shape_cast %57 : vector<96x128xf32> to vector<6x16x128xf32>
    %c0_23 = arith.constant 0 : index
    %c0_24 = arith.constant 0 : index
    %59 = vector.load %arg4[%c0_23, %c0_24] : memref<1x128xf32, #tpu.memory_space<vmem>>, vector<1x128xf32>
    %60 = vector.shape_cast %59 : vector<1x128xf32> to vector<1x1x128xf32>
    %61 = vector.broadcast %60 : vector<1x1x128xf32> to vector<6x16x128xf32>
    %62 = arith.addf %58, %61 : vector<6x16x128xf32>
    %cst_25 = arith.constant 0.000000e+00 : f32
    %63 = vector.broadcast %cst_25 : f32 to vector<6x16x128xf32>
    %64 = arith.maximumf %62, %63 : vector<6x16x128xf32>
    %65 = arith.truncf %64 : vector<6x16x128xf32> to vector<6x16x128xbf16>
    %c15_i32_26 = arith.constant 15 : i32
    %66 = tpu.dynamic_rotate %64 by %c15_i32_26 dim 1 : vector<6x16x128xf32>, i32 -> vector<6x16x128xf32>
    %67 = arith.truncf %66 : vector<6x16x128xf32> to vector<6x16x128xbf16>
    %c14_i32_27 = arith.constant 14 : i32
    %68 = tpu.dynamic_rotate %64 by %c14_i32_27 dim 1 : vector<6x16x128xf32>, i32 -> vector<6x16x128xf32>
    %69 = arith.truncf %68 : vector<6x16x128xf32> to vector<6x16x128xbf16>
    %70 = vector.extract_strided_slice %65 {offsets = [0, 0, 0], sizes = [4, 16, 128], strides = [1, 1, 1]} : vector<6x16x128xbf16> to vector<4x16x128xbf16>
    %71 = vector.extract_strided_slice %67 {offsets = [0, 0, 0], sizes = [4, 16, 128], strides = [1, 1, 1]} : vector<6x16x128xbf16> to vector<4x16x128xbf16>
    %72 = vector.extract_strided_slice %69 {offsets = [0, 0, 0], sizes = [4, 16, 128], strides = [1, 1, 1]} : vector<6x16x128xbf16> to vector<4x16x128xbf16>
    %73 = tpu.concatenate %70, %71, %72 in 2 : vector<4x16x128xbf16>, vector<4x16x128xbf16>, vector<4x16x128xbf16> -> vector<4x16x384xbf16>
    %74 = vector.shape_cast %73 : vector<4x16x384xbf16> to vector<64x384xbf16>
    %c0_28 = arith.constant 0 : index
    %c0_29 = arith.constant 0 : index
    %c0_30 = arith.constant 0 : index
    %75 = vector.load %arg5[%c0_28, %c0_29, %c0_30] : memref<3x384x128xbf16, #tpu.memory_space<vmem>>, vector<1x384x128xbf16>
    %76 = vector.shape_cast %75 : vector<1x384x128xbf16> to vector<384x128xbf16>
    %cst_31 = arith.constant dense<0.000000e+00> : vector<64x128xf32>
    %77 = tpu.matmul %74, %76, %cst_31 {dimension_numbers = #tpu.dot_dimension_numbers<[1], [0], [0], [1], [0, 0, 1, 1], [], []>} : vector<64x384xbf16>, vector<384x128xbf16>, vector<64x128xf32> -> vector<64x128xf32>
    %78 = vector.extract_strided_slice %65 {offsets = [1, 0, 0], sizes = [4, 16, 128], strides = [1, 1, 1]} : vector<6x16x128xbf16> to vector<4x16x128xbf16>
    %79 = vector.extract_strided_slice %67 {offsets = [1, 0, 0], sizes = [4, 16, 128], strides = [1, 1, 1]} : vector<6x16x128xbf16> to vector<4x16x128xbf16>
    %80 = vector.extract_strided_slice %69 {offsets = [1, 0, 0], sizes = [4, 16, 128], strides = [1, 1, 1]} : vector<6x16x128xbf16> to vector<4x16x128xbf16>
    %81 = tpu.concatenate %78, %79, %80 in 2 : vector<4x16x128xbf16>, vector<4x16x128xbf16>, vector<4x16x128xbf16> -> vector<4x16x384xbf16>
    %82 = vector.shape_cast %81 : vector<4x16x384xbf16> to vector<64x384xbf16>
    %c1_32 = arith.constant 1 : index
    %c0_33 = arith.constant 0 : index
    %c0_34 = arith.constant 0 : index
    %83 = vector.load %arg5[%c1_32, %c0_33, %c0_34] : memref<3x384x128xbf16, #tpu.memory_space<vmem>>, vector<1x384x128xbf16>
    %84 = vector.shape_cast %83 : vector<1x384x128xbf16> to vector<384x128xbf16>
    %cst_35 = arith.constant dense<0.000000e+00> : vector<64x128xf32>
    %85 = tpu.matmul %82, %84, %cst_35 {dimension_numbers = #tpu.dot_dimension_numbers<[1], [0], [0], [1], [0, 0, 1, 1], [], []>} : vector<64x384xbf16>, vector<384x128xbf16>, vector<64x128xf32> -> vector<64x128xf32>
    %86 = arith.addf %77, %85 : vector<64x128xf32>
    %87 = vector.extract_strided_slice %65 {offsets = [2, 0, 0], sizes = [4, 16, 128], strides = [1, 1, 1]} : vector<6x16x128xbf16> to vector<4x16x128xbf16>
    %88 = vector.extract_strided_slice %67 {offsets = [2, 0, 0], sizes = [4, 16, 128], strides = [1, 1, 1]} : vector<6x16x128xbf16> to vector<4x16x128xbf16>
    %89 = vector.extract_strided_slice %69 {offsets = [2, 0, 0], sizes = [4, 16, 128], strides = [1, 1, 1]} : vector<6x16x128xbf16> to vector<4x16x128xbf16>
    %90 = tpu.concatenate %87, %88, %89 in 2 : vector<4x16x128xbf16>, vector<4x16x128xbf16>, vector<4x16x128xbf16> -> vector<4x16x384xbf16>
    %91 = vector.shape_cast %90 : vector<4x16x384xbf16> to vector<64x384xbf16>
    %c2_36 = arith.constant 2 : index
    %c0_37 = arith.constant 0 : index
    %c0_38 = arith.constant 0 : index
    %92 = vector.load %arg5[%c2_36, %c0_37, %c0_38] : memref<3x384x128xbf16, #tpu.memory_space<vmem>>, vector<1x384x128xbf16>
    %93 = vector.shape_cast %92 : vector<1x384x128xbf16> to vector<384x128xbf16>
    %cst_39 = arith.constant dense<0.000000e+00> : vector<64x128xf32>
    %94 = tpu.matmul %91, %93, %cst_39 {dimension_numbers = #tpu.dot_dimension_numbers<[1], [0], [0], [1], [0, 0, 1, 1], [], []>} : vector<64x384xbf16>, vector<384x128xbf16>, vector<64x128xf32> -> vector<64x128xf32>
    %95 = arith.addf %86, %94 : vector<64x128xf32>
    %96 = vector.shape_cast %95 : vector<64x128xf32> to vector<4x16x128xf32>
    %c0_40 = arith.constant 0 : index
    %c0_41 = arith.constant 0 : index
    %97 = vector.load %arg6[%c0_40, %c0_41] : memref<1x128xf32, #tpu.memory_space<vmem>>, vector<1x128xf32>
    %98 = vector.shape_cast %97 : vector<1x128xf32> to vector<1x1x128xf32>
    %99 = vector.broadcast %98 : vector<1x1x128xf32> to vector<4x16x128xf32>
    %100 = arith.addf %96, %99 : vector<4x16x128xf32>
    %101 = vector.extract_strided_slice %26 {offsets = [2, 0, 0], sizes = [4, 16, 128], strides = [1, 1, 1]} : vector<8x16x128xf32> to vector<4x16x128xf32>
    %c14_i32_42 = arith.constant 14 : i32
    %102 = tpu.dynamic_rotate %101 by %c14_i32_42 dim 1 : vector<4x16x128xf32>, i32 -> vector<4x16x128xf32>
    %103 = arith.addf %100, %102 : vector<4x16x128xf32>
    %104 = vector.extract_strided_slice %103 {offsets = [0, 0, 0], sizes = [4, 12, 128], strides = [1, 1, 1]} : vector<4x16x128xf32> to vector<4x12x128xf32>
    %c0_43 = arith.constant 0 : index
    %c0_44 = arith.constant 0 : index
    %c0_45 = arith.constant 0 : index
    %c0_46 = arith.constant 0 : index
    %105 = vector.load %arg7[%c0_43, %c0_44, %c0_45, %c0_46] : memref<1x4x12x128xf32, #tpu.memory_space<vmem>>, vector<1x4x12x128xf32>
    %106 = vector.shape_cast %105 : vector<1x4x12x128xf32> to vector<4x12x128xf32>
    %107 = vector.shape_cast %104 : vector<4x12x128xf32> to vector<1x4x12x128xf32>
    tpu.vector_store %arg7[%c0_43, %c0_44, %c0_45, %c0_46], %107 {strides = array<i32>} : memref<1x4x12x128xf32, #tpu.memory_space<vmem>>, vector<1x4x12x128xf32>,
    return
  }
  func.func @transform_1(%arg0: i32, %arg1: i32) -> (i32, i32, i32) {
    %c0_i32 = arith.constant 0 : i32
    %c0_i32_0 = arith.constant 0 : i32
    %c0_i32_1 = arith.constant 0 : i32
    %c0_i32_2 = arith.constant 0 : i32
    return %c0_i32, %c0_i32_0, %c0_i32_1 : i32, i32, i32
  }
  func.func @transform_2(%arg0: i32, %arg1: i32) -> (i32, i32) {
    %c0_i32 = arith.constant 0 : i32
    %c0_i32_0 = arith.constant 0 : i32
    %c0_i32_1 = arith.constant 0 : i32
    return %c0_i32, %c0_i32_0 : i32, i32
  }
  func.func @transform_3(%arg0: i32, %arg1: i32) -> (i32, i32, i32) {
    %c0_i32 = arith.constant 0 : i32
    %c0_i32_0 = arith.constant 0 : i32
    %c0_i32_1 = arith.constant 0 : i32
    %c0_i32_2 = arith.constant 0 : i32
    return %c0_i32, %c0_i32_0, %c0_i32_1 : i32, i32, i32
  }
  func.func @transform_4(%arg0: i32, %arg1: i32) -> (i32, i32) {
    %c0_i32 = arith.constant 0 : i32
    %c0_i32_0 = arith.constant 0 : i32
    %c0_i32_1 = arith.constant 0 : i32
    return %c0_i32, %c0_i32_0 : i32, i32
  }
  func.func @transform_5(%arg0: i32, %arg1: i32) -> (i32, i32, i32, i32) {
    %c0_i32 = arith.constant 0 : i32
    %c0_i32_0 = arith.constant 0 : i32
    %c0_i32_1 = arith.constant 0 : i32
    return %arg0, %arg1, %c0_i32, %c0_i32_0 : i32, i32, i32, i32
  }
}

</mosaic_0001>

<llo_original>
// kernel: tpu_custom_call.1
$region0: #{tpu_custom_call.1}
  #allocation0 [shape = 'u32[]', space=smem, size = 0x4, offset = 0x4, fixed_abs, tag = 'smem constant byte address 0x4 - core index']
  #allocation1 [shape = 'u32[144,128]{1,0:T(1,128)}', space=vmem, size = 0x12000, scoped, tag = 'internal scratch']
  #allocation2 [shape = 'f32[2,8,16,128]{3,2,1,0:T(8,128)}', space=vmem, size = 0x20000, scoped, tag = 'scratch operand']
  #allocation3 [shape = 's32[2]{0}', space=sflag, size = 0x8, scoped, tag = 'scratch operand']
  #allocation13 [shape = 's32[]', space=sflag, size = 0x4, offset = 0, fixed_abs, tag = 'sflag constant byte address 0x0 - dummy sync flag']
  #allocation14 [shape = 's32[]', space=sflag, size = 0x4, offset = 0, fixed_abs, tag = 'sflag constant byte address 0x0 - dummy sync flag']
  #allocation15 [shape = 'u32[]', space=smem, size = 0x4, offset = 0x44, fixed_abs, tag = 'smem constant byte address 0x44 - assertion arg 0']
  #allocation16 [shape = 'u32[]', space=smem, size = 0x4, offset = 0x48, fixed_abs, tag = 'smem constant byte address 0x48 - assertion arg 1']
  #allocation17 [shape = 's32[]', space=sflag, size = 0x4, offset = 0, fixed_abs, tag = 'sflag constant byte address 0x0 - dummy sync flag']
  #allocation18 [shape = 's32[]', space=sflag, size = 0x4, offset = 0, fixed_abs, tag = 'sflag constant byte address 0x0 - dummy sync flag']
  %s0 = inlined_call_operand.hbm [shape: f32[2,16,16,128], index: 0, kind: input, shape index: {}]
  %s1 = inlined_call_operand.hbm [shape: bf16[3,384,128], index: 1, kind: input, shape index: {}]
  %s2 = inlined_call_operand.hbm [shape: f32[1,128], index: 2, kind: input, shape index: {}]
  %s3 = inlined_call_operand.hbm [shape: bf16[3,384,128], index: 3, kind: input, shape index: {}]
  %s4 = inlined_call_operand.hbm [shape: f32[1,128], index: 4, kind: input, shape index: {}]
  %s5 = inlined_call_operand.hbm [shape: f32[2,12,12,128], index: 5, kind: output, shape index: {}]
  %s6 = sld [smem:[#allocation0]]
  $region81: #{tpu_custom_call.1} parent=0
    _
  %s8 = ssub.s32 1, %s6
  %s9 = scalar_select 0, %s8, %s6
  $region1: #{tpu_custom_call.1} parent=0
    #allocation4 [shape = 'u8[294912]{0}', space=vmem, size = 0x48000, scoped, tag = 'input window, operand 1, single buffered']
    #allocation5 [shape = 's32[2]{0}', space=sflag, size = 0x8, scoped, tag = 'scoped memory for tpu_custom_call.1']
    #allocation6 [shape = 's32[2]{0}', space=sflag, size = 0x8, scoped, tag = 'scoped memory for tpu_custom_call.1']
    #allocation7 [shape = 'u8[512]{0}', space=vmem, size = 0x400, scoped, tag = 'input window, operand 2, single buffered']
    #allocation8 [shape = 's32[1]{0}', space=sflag, size = 0x4, scoped, tag = 'scoped memory for tpu_custom_call.1']
    #allocation9 [shape = 'u8[294912]{0}', space=vmem, size = 0x48000, scoped, tag = 'input window, operand 3, single buffered']
    #allocation10 [shape = 'u8[512]{0}', space=vmem, size = 0x400, scoped, tag = 'input window, operand 4, single buffered']
    #allocation11 [shape = 's32[1]{0}', space=sflag, size = 0x4, scoped, tag = 'scoped memory for tpu_custom_call.1']
    #allocation12 [shape = 'u8[65536]{0}', space=vmem, size = 0x10000, scoped, tag = 'output window, operand 0']
    %10 = vsyncpa [#allocation5], 0
    %11 = vsyncpa [#allocation8], 0
    %12 = vsyncpa [#allocation11], 0
    %13 = vsyncpa [#allocation6], 0
    %s14 = scalar_lea.sflag [#allocation6], 1
    %15 = vsyncpa %s14, 0
    loop: start=0, step=1, limit=8
    $region2: #{tpu_custom_call.1} parent=1 // loop_pre_header
      _
    $region3: #{tpu_custom_call.1} parent=1 // loop_header
      %s17 = sphi 0, %s21
      %p18 = scmp.ge.s32.totalorder %s17, 8
      %s24 = sphi 0, %s36
      %s25 = sphi 0, %s32
      %s26 = sphi 0, %s24
      %s27 = sphi 0, %s25
      %s28 = sphi 0, %s26
      %s29 = sphi 0, %s27
      %s37 = sphi 0, %s37
      %s39 = sphi 0, %s37
      %s40 = sphi 0, %s39
      %s54 = sphi 0, %s40
      %s58 = sphi 0, %s58
      %s60 = sphi 0, %s58
      %s61 = sphi 0, %s60
      %s75 = sphi 0, %s61
      %s79 = sphi 0, %s79
      %s81 = sphi 0, %s79
      %s82 = sphi 0, %s81
      %s96 = sphi 0, %s82
      %s100 = sphi 0, %s100
      %s102 = sphi 0, %s100
      %s103 = sphi 0, %s102
      %s117 = sphi 0, %s103
      %s125 = sphi 0, %s127
      %s128 = sphi 0, %s125
      %s129 = sphi 0, %s128
      %s145 = sphi 0, %s129
    $region4: #{tpu_custom_call.1} parent=1 // loop_header_branch
      %20 = sbr.rel (%p18) target = $region8
    $region5: #{tpu_custom_call.1} parent=1 // loop_body
      %s22 = ssub.s32 %s17, 1
      %s23 = ssub.s32 %s17, 2
      %s30 = sadd.s32 1, %s25
      %p31 = scmp.ge.s32.totalorder %s30, 3
      %s32 = scalar_select %p31, 0, %s30
      %s33 = sadd.s32 1, %s24
      %s34 = scalar_select %p31, %s33, %s24
      %p35 = scmp.ge.s32.totalorder %s34, 2
      %s36 = scalar_select %p35, 0, %s34
      %s38 = sadd.s32 %s37, 1
      %p41 = scmp.eq.s32.totalorder %s17, 5
      %p42 = scmp.ne.s32.totalorder %s37, %s39
      %p43 = scmp.eq.s32.totalorder %s17, 0
      %p44 = por %p42, %p43
      %p45 = scmp.ne.s32.totalorder %s37, %s39
      %p46 = scmp.eq.s32.totalorder %s22, 5
      %p47 = por %p45, %p46
      %p48 = scmp.ne.s32.totalorder %s39, %s40
      %p49 = scmp.eq.s32.totalorder %s22, 0
      %p50 = por %p48, %p49
      %p51 = scmp.ne.s32.totalorder %s39, %s40
      %p52 = scmp.eq.s32.totalorder %s23, 5
      %p53 = por %p51, %p52
      %p55 = scmp.ne.s32.totalorder %s40, %s54
      %p56 = scmp.eq.s32.totalorder %s23, 0
      %p57 = por %p55, %p56
      %s59 = sadd.s32 %s58, 1
      %p62 = scmp.eq.s32.totalorder %s17, 5
      %p63 = scmp.ne.s32.totalorder %s58, %s60
      %p64 = scmp.eq.s32.totalorder %s17, 0
      %p65 = por %p63, %p64
      %p66 = scmp.ne.s32.totalorder %s58, %s60
      %p67 = scmp.eq.s32.totalorder %s22, 5
      %p68 = por %p66, %p67
      %p69 = scmp.ne.s32.totalorder %s60, %s61
      %p70 = scmp.eq.s32.totalorder %s22, 0
      %p71 = por %p69, %p70
      %p72 = scmp.ne.s32.totalorder %s60, %s61
      %p73 = scmp.eq.s32.totalorder %s23, 5
      %p74 = por %p72, %p73
      %p76 = scmp.ne.s32.totalorder %s61, %s75
      %p77 = scmp.eq.s32.totalorder %s23, 0
      %p78 = por %p76, %p77
      %s80 = sadd.s32 %s79, 1
      %p83 = scmp.eq.s32.totalorder %s17, 5
      %p84 = scmp.ne.s32.totalorder %s79, %s81
      %p85 = scmp.eq.s32.totalorder %s17, 0
      %p86 = por %p84, %p85
      %p87 = scmp.ne.s32.totalorder %s79, %s81
      %p88 = scmp.eq.s32.totalorder %s22, 5
      %p89 = por %p87, %p88
      %p90 = scmp.ne.s32.totalorder %s81, %s82
      %p91 = scmp.eq.s32.totalorder %s22, 0
      %p92 = por %p90, %p91
      %p93 = scmp.ne.s32.totalorder %s81, %s82
      %p94 = scmp.eq.s32.totalorder %s23, 5
      %p95 = por %p93, %p94
      %p97 = scmp.ne.s32.totalorder %s82, %s96
      %p98 = scmp.eq.s32.totalorder %s23, 0
      %p99 = por %p97, %p98
      %s101 = sadd.s32 %s100, 1
      %p104 = scmp.eq.s32.totalorder %s17, 5
      %p105 = scmp.ne.s32.totalorder %s100, %s102
      %p106 = scmp.eq.s32.totalorder %s17, 0
      %p107 = por %p105, %p106
      %p108 = scmp.ne.s32.totalorder %s100, %s102
      %p109 = scmp.eq.s32.totalorder %s22, 5
      %p110 = por %p108, %p109
      %p111 = scmp.ne.s32.totalorder %s102, %s103
      %p112 = scmp.eq.s32.totalorder %s22, 0
      %p113 = por %p111, %p112
      %p114 = scmp.ne.s32.totalorder %s102, %s103
      %p115 = scmp.eq.s32.totalorder %s23, 5
      %p116 = por %p114, %p115
      %p118 = scmp.ne.s32.totalorder %s103, %s117
      %p119 = scmp.eq.s32.totalorder %s23, 0
      %p120 = por %p118, %p119
      %s121 = ssub.s32 %s24, %s36
      %s122 = ssub.s32 %s25, %s32
      %s123 = sor.u32 %s121, %s122
      %p124 = scmp.eq.s32.totalorder %s123, 0
      %s126 = sadd.s32 %s125, 1
      %s127 = scalar_select %p124, %s125, %s126
      %p130 = pneg %p124
      %p131 = scmp.eq.s32.totalorder %s17, 5
      %p132 = por %p130, %p131
      %p133 = scmp.ne.s32.totalorder %s125, %s128
      %p134 = scmp.eq.s32.totalorder %s17, 0
      %p135 = por %p133, %p134
      %p136 = scmp.ne.s32.totalorder %s125, %s128
      %p137 = scmp.eq.s32.totalorder %s22, 5
      %p138 = por %p136, %p137
      %p139 = scmp.ne.s32.totalorder %s128, %s129
      %p140 = scmp.eq.s32.totalorder %s22, 0
      %p141 = por %p139, %p140
      %p142 = scmp.ne.s32.totalorder %s128, %s129
      %p143 = scmp.eq.s32.totalorder %s23, 5
      %p144 = por %p142, %p143
      %p146 = scmp.ne.s32.totalorder %s129, %s145
      %p147 = scmp.eq.s32.totalorder %s23, 0
      %p148 = por %p146, %p147
      %p149 = scmp.le.s32.totalorder 1, %s17
      %p150 = scmp.lt.s32.totalorder %s17, 7
      %p151 = pnand %p149, %p150
      %p152 = pneg %p151
      // Predicated region
      $region9: #{tpu_custom_call.1} parent=5 // pred_check
        _
      $region10: #{tpu_custom_call.1} parent=5 // pred_check_branch
        %154 = sbr.rel (%p151) target = $region12
      $region11: #{tpu_custom_call.1} parent=5 // pred_region
        %s155 = ssub.s32 %s17, 1
        // Predicated region
        $region13: #{tpu_custom_call.1} parent=11 // pred_check
          %p156 = pneg %p50
        $region14: #{tpu_custom_call.1} parent=11 // pred_check_branch
          %158 = sbr.rel (%p156) target = $region16
        $region15: #{tpu_custom_call.1} parent=11 // pred_region
          %s160 = ssub.s32 9216, 9216
          %161 = vsyncadd [#allocation5], %s160
          %s162 = sshll.u32 [#allocation4], 4
          %s163 = int_to_ptr.vmem [resolvable:$true] %s162
          %168 = dma.hbm_to_vmem [thread:$0]  %s1, 9216, %s163, [#allocation5], 64, 64, 4
        $region16: #{tpu_custom_call.1} parent=11 // pred_fallthru
          _
        // Predicated region
        $region17: #{tpu_custom_call.1} parent=11 // pred_check
          %p169 = pneg %p71
        $region18: #{tpu_custom_call.1} parent=11 // pred_check_branch
          %171 = sbr.rel (%p169) target = $region20
        $region19: #{tpu_custom_call.1} parent=11 // pred_region
          %s173 = ssub.s32 16, 16
          %174 = vsyncadd [#allocation8], %s173
          %s176 = sshll.u32 [#allocation7], 4
          %s177 = int_to_ptr.vmem [resolvable:$true] %s176
          %179 = dma.hbm_to_vmem [thread:$0]  %s2, 16, %s177, [#allocation8]
        $region20: #{tpu_custom_call.1} parent=11 // pred_fallthru
          _
        // Predicated region
        $region21: #{tpu_custom_call.1} parent=11 // pred_check
          %p180 = pneg %p92
        $region22: #{tpu_custom_call.1} parent=11 // pred_check_branch
          %182 = sbr.rel (%p180) target = $region24
        $region23: #{tpu_custom_call.1} parent=11 // pred_region
          %s184 = ssub.s32 9216, 9216
          %185 = vsyncadd [#allocation8], %s184
          %s186 = sshll.u32 [#allocation9], 4
          %s187 = int_to_ptr.vmem [resolvable:$true] %s186
          %192 = dma.hbm_to_vmem [thread:$0]  %s3, 9216, %s187, [#allocation8], 64, 64, 4
        $region24: #{tpu_custom_call.1} parent=11 // pred_fallthru
          _
        // Predicated region
        $region25: #{tpu_custom_call.1} parent=11 // pred_check
          %p193 = pneg %p113
        $region26: #{tpu_custom_call.1} parent=11 // pred_check_branch
          %195 = sbr.rel (%p193) target = $region28
        $region27: #{tpu_custom_call.1} parent=11 // pred_region
          %s197 = ssub.s32 16, 16
          %198 = vsyncadd [#allocation11], %s197
          %s200 = sshll.u32 [#allocation10], 4
          %s201 = int_to_ptr.vmem [resolvable:$true] %s200
          %203 = dma.hbm_to_vmem [thread:$0]  %s4, 16, %s201, [#allocation11]
        $region28: #{tpu_custom_call.1} parent=11 // pred_fallthru
          _
      $region12: #{tpu_custom_call.1} parent=5 // pred_fallthru
        _
      %p204 = scmp.lt.s32.totalorder %s17, 6
      // Predicated region
      $region29: #{tpu_custom_call.1} parent=5 // pred_check
        %p205 = pneg %p204
      $region30: #{tpu_custom_call.1} parent=5 // pred_check_branch
        %207 = sbr.rel (%p205) target = $region32
      $region31: #{tpu_custom_call.1} parent=5 // pred_region
        _
      $region32: #{tpu_custom_call.1} parent=5 // pred_fallthru
        _
      %p208 = scmp.le.s32.totalorder 1, %s17
      %p209 = scmp.lt.s32.totalorder %s17, 7
      %p210 = pnand %p208, %p209
      %p211 = pneg %p210
      // Predicated region
      $region33: #{tpu_custom_call.1} parent=5 // pred_check
        _
      $region34: #{tpu_custom_call.1} parent=5 // pred_check_branch
        %213 = sbr.rel (%p210) target = $region36
      $region35: #{tpu_custom_call.1} parent=5 // pred_region
        %s214 = ssub.s32 %s17, 1
        // Predicated region
        $region37: #{tpu_custom_call.1} parent=35 // pred_check
          %p215 = pneg %p50
        $region38: #{tpu_custom_call.1} parent=35 // pred_check_branch
          %217 = sbr.rel (%p215) target = $region40
        $region39: #{tpu_custom_call.1} parent=35 // pred_region
          %218 = dma.done [#allocation5], 9216
        $region40: #{tpu_custom_call.1} parent=35 // pred_fallthru
          _
        // Predicated region
        $region41: #{tpu_custom_call.1} parent=35 // pred_check
          %p219 = pneg %p71
        $region42: #{tpu_custom_call.1} parent=35 // pred_check_branch
          %221 = sbr.rel (%p219) target = $region44
        $region43: #{tpu_custom_call.1} parent=35 // pred_region
          %222 = dma.done [#allocation8], 16
        $region44: #{tpu_custom_call.1} parent=35 // pred_fallthru
          _
        // Predicated region
        $region45: #{tpu_custom_call.1} parent=35 // pred_check
          %p223 = pneg %p92
        $region46: #{tpu_custom_call.1} parent=35 // pred_check_branch
          %225 = sbr.rel (%p223) target = $region48
        $region47: #{tpu_custom_call.1} parent=35 // pred_region
          %226 = dma.done [#allocation8], 9216
        $region48: #{tpu_custom_call.1} parent=35 // pred_fallthru
          _
        // Predicated region
        $region49: #{tpu_custom_call.1} parent=35 // pred_check
          %p227 = pneg %p113
        $region50: #{tpu_custom_call.1} parent=35 // pred_check_branch
          %229 = sbr.rel (%p227) target = $region52
        $region51: #{tpu_custom_call.1} parent=35 // pred_region
          %230 = dma.done [#allocation11], 16
        $region52: #{tpu_custom_call.1} parent=35 // pred_fallthru
          _
        %p231 = pneg %p50
        %p232 = pneg %p47
        %p233 = pneg %p71
        %p234 = pneg %p68
        %p235 = pneg %p92
        %p236 = pneg %p89
        %p237 = pneg %p113
        %p238 = pneg %p110
        %p239 = pneg %p141
        %p240 = pneg %p138
        %s241 = sand.u32 %s128, 1
        %s242 = scalar_lea.sflag [#allocation6], %s241
        %s243 = sand.u32 %s128, 1
        %s244 = smul.addr %s243, 64
        %s245 = scalar_lea.vmem [#allocation12], %s244
        %s246 = smul.u32 4, %s27
        %p248 = scmp.lt.s32.totalorder %s27, 0
        %s249 = ssub.s32 0, %s27
        %s250 = scalar_select %p248, %s249, %s27
        %s251 = sand.u32 %s250, 1
        %s252 = ssub.s32 0, %s251
        %s253 = scalar_select %p248, %s252, %s251
        %p254 = scmp.ne.s32.totalorder %s253, 0
        %p255 = scmp.lt.s32.totalorder %s253, 0
        %p256 = pnand %p255, %p254
        %p257 = pneg %p256
        %s258 = sadd.s32 %s253, 2
        %s259 = scalar_select %p257, %s258, %s253
        %p260 = scmp.eq.s32.totalorder %s27, 0
        // Predicated region
        $region53: #{tpu_custom_call.1} parent=35 // pred_check
          %p261 = pneg %p260
        $region54: #{tpu_custom_call.1} parent=35 // pred_check_branch
          %263 = sbr.rel (%p261) target = $region56
        $region55: #{tpu_custom_call.1} parent=35 // pred_region
          %s264 = smul.u32 %s26, 256
          %s265 = smul.addr %s264, 16
          %s266 = scalar_lea.hbm %s0, %s265
          %s267 = smul.u32 %s259, 128
          %s268 = scalar_lea.vmem [#allocation2], %s267
          %s269 = scalar_lea.sflag [#allocation3], %s259
          // Predicated region
          $region57: #{tpu_custom_call.1} parent=55 // pred_check
            _
          $region58: #{tpu_custom_call.1} parent=55 // pred_check_branch
            %271 = sbr.rel target = $region60
          $region59: #{tpu_custom_call.1} parent=55 // pred_region
            %272 = sst [smem:[#allocation15]] [#allocation14]
            %273 = sst [smem:[#allocation16]] [#allocation13]
          $region60: #{tpu_custom_call.1} parent=55 // pred_fallthru
            _
          %275 = shalt.err (0)
          %s277 = sshll.u32 %s268, 4
          %s278 = int_to_ptr.vmem [resolvable:$true] %s277
          %280 = dma.hbm_to_vmem [thread:$0]  %s266, 2048, %s278, %s269
        $region56: #{tpu_custom_call.1} parent=35 // pred_fallthru
          _
        %s281 = smul.u32 %s259, 128
        %s282 = scalar_lea.vmem [#allocation2], %s281
        %s283 = scalar_lea.sflag [#allocation3], %s259
        %s284 = smul.u32 8, 16
        %s285 = smul.u32 %s284, 1
        %s286 = sshll.u32 %s285, 4
        %287 = dma.done %s283, %s286
        %s288 = sadd.s32 %s27, 1
        %p289 = scmp.lt.s32.totalorder %s288, 3
        // Predicated region
        $region61: #{tpu_custom_call.1} parent=35 // pred_check
          %p290 = pneg %p289
        $region62: #{tpu_custom_call.1} parent=35 // pred_check_branch
          %292 = sbr.rel (%p290) target = $region64
        $region63: #{tpu_custom_call.1} parent=35 // pred_region
          %s293 = ssub.s32 1, %s259
          %s294 = smul.u32 %s288, 4
          %s295 = smul.u32 %s294, 16
          %s296 = smul.u32 %s26, 256
          %s297 = sadd.s32 %s295, %s296
          %s298 = smul.addr %s297, 16
          %s299 = scalar_lea.hbm %s0, %s298
          %s300 = smul.u32 %s293, 128
          %s301 = scalar_lea.vmem [#allocation2], %s300
          %s302 = scalar_lea.sflag [#allocation3], %s293
          // Predicated region
          $region65: #{tpu_custom_call.1} parent=63 // pred_check
            _
          $region66: #{tpu_custom_call.1} parent=63 // pred_check_branch
            %304 = sbr.rel target = $region68
          $region67: #{tpu_custom_call.1} parent=63 // pred_region
            %305 = sst [smem:[#allocation15]] [#allocation18]
            %306 = sst [smem:[#allocation16]] [#allocation17]
          $region68: #{tpu_custom_call.1} parent=63 // pred_fallthru
            _
          %308 = shalt.err (0)
          %s310 = sshll.u32 %s301, 4
          %s311 = int_to_ptr.vmem [resolvable:$true] %s310
          %313 = dma.hbm_to_vmem [thread:$0]  %s299, 2048, %s311, %s302
        $region64: #{tpu_custom_call.1} parent=35 // pred_fallthru
          _
        %v314 = vld [vmem:[%s282] sm:$0xff]
        %v315 = vld [vmem:[%s282 + $0x8] sm:$0xff]
        %v316 = vld [vmem:[%s282 + $0x10] sm:$0xff]
        %v317 = vld [vmem:[%s282 + $0x18] sm:$0xff]
        %v318 = vld [vmem:[%s282 + $0x20] sm:$0xff]
        %v319 = vld [vmem:[%s282 + $0x28] sm:$0xff]
        %v320 = vld [vmem:[%s282 + $0x30] sm:$0xff]
        %v321 = vld [vmem:[%s282 + $0x38] sm:$0xff]
        %v322 = vld [vmem:[%s282 + $0x40] sm:$0xff]
        %v323 = vld [vmem:[%s282 + $0x48] sm:$0xff]
        %v324 = vld [vmem:[%s282 + $0x50] sm:$0xff]
        %v325 = vld [vmem:[%s282 + $0x58] sm:$0xff]
        %v326 = vld [vmem:[%s282 + $0x60] sm:$0xff]
        %v327 = vld [vmem:[%s282 + $0x68] sm:$0xff]
        %v328 = vld [vmem:[%s282 + $0x70] sm:$0xff]
        %v329 = vld [vmem:[%s282 + $0x78] sm:$0xff]
        %v330 = vpack.c.bf16 %v315, %v314
        %v331 = vpack.c.bf16 %v317, %v316
        %v332 = vpack.c.bf16 %v319, %v318
        %v333 = vpack.c.bf16 %v321, %v320
        %v334 = vpack.c.bf16 %v323, %v322
        %v335 = vpack.c.bf16 %v325, %v324
        %v336 = vpack.c.bf16 %v327, %v326
        %v337 = vpack.c.bf16 %v329, %v328
        %v338 = vrot.slane %v314, 1
        %v339 = vrot.slane %v316, 1
        %v340 = vrot.slane %v318, 1
        %v341 = vrot.slane %v320, 1
        %v342 = vrot.slane %v322, 1
        %v343 = vrot.slane %v324, 1
        %v344 = vrot.slane %v326, 1
        %v345 = vrot.slane %v328, 1
        %v346 = vrot.slane %v315, 1
        %v347 = vrot.slane %v317, 1
        %v348 = vrot.slane %v319, 1
        %v349 = vrot.slane %v321, 1
        %v350 = vrot.slane %v323, 1
        %v351 = vrot.slane %v325, 1
        %v352 = vrot.slane %v327, 1
        %v353 = vrot.slane %v329, 1
        %v354 = vlaneseq
        %v355 = vshrl.u32 %v354, 7
        %vm356 = vcmp.lt.s32.totalorder %v355, 7
        %v357 = vsel %vm356, %v338, %v346
        %v358 = vsel %vm356, %v339, %v347
        %v359 = vsel %vm356, %v340, %v348
        %v360 = vsel %vm356, %v341, %v349
        %v361 = vsel %vm356, %v342, %v350
        %v362 = vsel %vm356, %v343, %v351
        %v363 = vsel %vm356, %v344, %v352
        %v364 = vsel %vm356, %v345, %v353
        %v365 = vsel %vm356, %v346, %v338
        %v366 = vsel %vm356, %v347, %v339
        %v367 = vsel %vm356, %v348, %v340
        %v368 = vsel %vm356, %v349, %v341
        %v369 = vsel %vm356, %v350, %v342
        %v370 = vsel %vm356, %v351, %v343
        %v371 = vsel %vm356, %v352, %v344
        %v372 = vsel %vm356, %v353, %v345
        %v373 = vpack.c.bf16 %v365, %v357
        %v374 = vpack.c.bf16 %v366, %v358
        %v375 = vpack.c.bf16 %v367, %v359
        %v376 = vpack.c.bf16 %v368, %v360
        %v377 = vpack.c.bf16 %v369, %v361
        %v378 = vpack.c.bf16 %v370, %v362
        %v379 = vpack.c.bf16 %v371, %v363
        %v380 = vpack.c.bf16 %v372, %v364
        %v381 = vrot.slane %v314, 2
        %v382 = vrot.slane %v316, 2
        %v383 = vrot.slane %v318, 2
        %v384 = vrot.slane %v320, 2
        %v385 = vrot.slane %v322, 2
        %v386 = vrot.slane %v324, 2
        %v387 = vrot.slane %v326, 2
        %v388 = vrot.slane %v328, 2
        %v389 = vrot.slane %v315, 2
        %v390 = vrot.slane %v317, 2
        %v391 = vrot.slane %v319, 2
        %v392 = vrot.slane %v321, 2
        %v393 = vrot.slane %v323, 2
        %v394 = vrot.slane %v325, 2
        %v395 = vrot.slane %v327, 2
        %v396 = vrot.slane %v329, 2
        %vm397 = vcmp.lt.s32.totalorder %v355, 6
        %v398 = vsel %vm397, %v381, %v389
        %v399 = vsel %vm397, %v382, %v390
        %v400 = vsel %vm397, %v383, %v391
        %v401 = vsel %vm397, %v384, %v392
        %v402 = vsel %vm397, %v385, %v393
        %v403 = vsel %vm397, %v386, %v394
        %v404 = vsel %vm397, %v387, %v395
        %v405 = vsel %vm397, %v388, %v396
        %v406 = vsel %vm397, %v389, %v381
        %v407 = vsel %vm397, %v390, %v382
        %v408 = vsel %vm397, %v391, %v383
        %v409 = vsel %vm397, %v392, %v384
        %v410 = vsel %vm397, %v393, %v385
        %v411 = vsel %vm397, %v394, %v386
        %v412 = vsel %vm397, %v395, %v387
        %v413 = vsel %vm397, %v396, %v388
        %v414 = vpack.c.bf16 %v406, %v398
        %v415 = vpack.c.bf16 %v407, %v399
        %v416 = vpack.c.bf16 %v408, %v400
        %v417 = vpack.c.bf16 %v409, %v401
        %v418 = vpack.c.bf16 %v410, %v402
        %v419 = vpack.c.bf16 %v411, %v403
        %v420 = vpack.c.bf16 %v412, %v404
        %v421 = vpack.c.bf16 %v413, %v405
        %v422 = vld [vmem:[#allocation4] sm:$0xf]
        %v423 = vld [vmem:[#allocation4 + $0x4] sm:$0xf]
        %v424 = vld [vmem:[#allocation4 + $0x8] sm:$0xf]
        %v425 = vld [vmem:[#allocation4 + $0xc] sm:$0xf]
        %v426 = vld [vmem:[#allocation4 + $0x10] sm:$0xf]
        %v427 = vld [vmem:[#allocation4 + $0x14] sm:$0xf]
        %v428 = vld [vmem:[#allocation4 + $0x18] sm:$0xf]
        %v429 = vld [vmem:[#allocation4 + $0x1c] sm:$0xf]
        %v430 = vld [vmem:[#allocation4 + $0x20] sm:$0xf]
        %v431 = vld [vmem:[#allocation4 + $0x24] sm:$0xf]
        %v432 = vld [vmem:[#allocation4 + $0x28] sm:$0xf]
        %v433 = vld [vmem:[#allocation4 + $0x2c] sm:$0xf]
        %v434 = vld [vmem:[#allocation4 + $0x30] sm:$0xf]
        %v435 = vld [vmem:[#allocation4 + $0x34] sm:$0xf]
        %v436 = vld [vmem:[#allocation4 + $0x38] sm:$0xf]
        %v437 = vld [vmem:[#allocation4 + $0x3c] sm:$0xf]
        %v438 = vld [vmem:[#allocation4 + $0x40] sm:$0xf]
        %v439 = vld [vmem:[#allocation4 + $0x44] sm:$0xf]
        %v440 = vld [vmem:[#allocation4 + $0x48] sm:$0xf]
        %v441 = vld [vmem:[#allocation4 + $0x4c] sm:$0xf]
        %v442 = vld [vmem:[#allocation4 + $0x50] sm:$0xf]
        %v443 = vld [vmem:[#allocation4 + $0x54] sm:$0xf]
        %v444 = vld [vmem:[#allocation4 + $0x58] sm:$0xf]
        %v445 = vld [vmem:[#allocation4 + $0x5c] sm:$0xf]
        %v446 = vld [vmem:[#allocation4 + $0x60] sm:$0xf]
        %v447 = vld [vmem:[#allocation4 + $0x64] sm:$0xf]
        %v448 = vld [vmem:[#allocation4 + $0x68] sm:$0xf]
        %v449 = vld [vmem:[#allocation4 + $0x6c] sm:$0xf]
        %v450 = vld [vmem:[#allocation4 + $0x70] sm:$0xf]
        %v451 = vld [vmem:[#allocation4 + $0x74] sm:$0xf]
        %v452 = vld [vmem:[#allocation4 + $0x78] sm:$0xf]
        %v453 = vld [vmem:[#allocation4 + $0x7c] sm:$0xf]
        %v454 = vld [vmem:[#allocation4 + $0x80] sm:$0xf]
        %v455 = vld [vmem:[#allocation4 + $0x84] sm:$0xf]
        %v456 = vld [vmem:[#allocation4 + $0x88] sm:$0xf]
        %v457 = vld [vmem:[#allocation4 + $0x8c] sm:$0xf]
        %v458 = vld [vmem:[#allocation4 + $0x90] sm:$0xf]
        %v459 = vld [vmem:[#allocation4 + $0x94] sm:$0xf]
        %v460 = vld [vmem:[#allocation4 + $0x98] sm:$0xf]
        %v461 = vld [vmem:[#allocation4 + $0x9c] sm:$0xf]
        %v462 = vld [vmem:[#allocation4 + $0xa0] sm:$0xf]
        %v463 = vld [vmem:[#allocation4 + $0xa4] sm:$0xf]
        %v464 = vld [vmem:[#allocation4 + $0xa8] sm:$0xf]
        %v465 = vld [vmem:[#allocation4 + $0xac] sm:$0xf]
        %v466 = vld [vmem:[#allocation4 + $0xb0] sm:$0xf]
        %v467 = vld [vmem:[#allocation4 + $0xb4] sm:$0xf]
        %v468 = vld [vmem:[#allocation4 + $0xb8] sm:$0xf]
        %v469 = vld [vmem:[#allocation4 + $0xbc] sm:$0xf]
        %s470 = scalar_lea.vmem [#allocation4], 192
        %v471 = vld [vmem:[%s470] sm:$0xf]
        %v472 = vld [vmem:[%s470 + $0x4] sm:$0xf]
        %v473 = vld [vmem:[%s470 + $0x8] sm:$0xf]
        %v474 = vld [vmem:[%s470 + $0xc] sm:$0xf]
        %v475 = vld [vmem:[%s470 + $0x10] sm:$0xf]
        %v476 = vld [vmem:[%s470 + $0x14] sm:$0xf]
        %v477 = vld [vmem:[%s470 + $0x18] sm:$0xf]
        %v478 = vld [vmem:[%s470 + $0x1c] sm:$0xf]
        %v479 = vld [vmem:[%s470 + $0x20] sm:$0xf]
        %v480 = vld [vmem:[%s470 + $0x24] sm:$0xf]
        %v481 = vld [vmem:[%s470 + $0x28] sm:$0xf]
        %v482 = vld [vmem:[%s470 + $0x2c] sm:$0xf]
        %v483 = vld [vmem:[%s470 + $0x30] sm:$0xf]
        %v484 = vld [vmem:[%s470 + $0x34] sm:$0xf]
        %v485 = vld [vmem:[%s470 + $0x38] sm:$0xf]
        %v486 = vld [vmem:[%s470 + $0x3c] sm:$0xf]
        %v487 = vld [vmem:[%s470 + $0x40] sm:$0xf]
        %v488 = vld [vmem:[%s470 + $0x44] sm:$0xf]
        %v489 = vld [vmem:[%s470 + $0x48] sm:$0xf]
        %v490 = vld [vmem:[%s470 + $0x4c] sm:$0xf]
        %v491 = vld [vmem:[%s470 + $0x50] sm:$0xf]
        %v492 = vld [vmem:[%s470 + $0x54] sm:$0xf]
        %v493 = vld [vmem:[%s470 + $0x58] sm:$0xf]
        %v494 = vld [vmem:[%s470 + $0x5c] sm:$0xf]
        %v495 = vld [vmem:[%s470 + $0x60] sm:$0xf]
        %v496 = vld [vmem:[%s470 + $0x64] sm:$0xf]
        %v497 = vld [vmem:[%s470 + $0x68] sm:$0xf]
        %v498 = vld [vmem:[%s470 + $0x6c] sm:$0xf]
        %v499 = vld [vmem:[%s470 + $0x70] sm:$0xf]
        %v500 = vld [vmem:[%s470 + $0x74] sm:$0xf]
        %v501 = vld [vmem:[%s470 + $0x78] sm:$0xf]
        %v502 = vld [vmem:[%s470 + $0x7c] sm:$0xf]
        %v503 = vld [vmem:[%s470 + $0x80] sm:$0xf]
        %v504 = vld [vmem:[%s470 + $0x84] sm:$0xf]
        %v505 = vld [vmem:[%s470 + $0x88] sm:$0xf]
        %v506 = vld [vmem:[%s470 + $0x8c] sm:$0xf]
        %v507 = vld [vmem:[%s470 + $0x90] sm:$0xf]
        %v508 = vld [vmem:[%s470 + $0x94] sm:$0xf]
        %v509 = vld [vmem:[%s470 + $0x98] sm:$0xf]
        %v510 = vld [vmem:[%s470 + $0x9c] sm:$0xf]
        %v511 = vld [vmem:[%s470 + $0xa0] sm:$0xf]
        %v512 = vld [vmem:[%s470 + $0xa4] sm:$0xf]
        %v513 = vld [vmem:[%s470 + $0xa8] sm:$0xf]
        %v514 = vld [vmem:[%s470 + $0xac] sm:$0xf]
        %v515 = vld [vmem:[%s470 + $0xb0] sm:$0xf]
        %v516 = vld [vmem:[%s470 + $0xb4] sm:$0xf]
        %v517 = vld [vmem:[%s470 + $0xb8] sm:$0xf]
        %v518 = vld [vmem:[%s470 + $0xbc] sm:$0xf]
        %v567 = vunpack.c.l.b16 %v471
        %v568 = vunpack.c.l.b16 %v472
        %v569 = vunpack.c.l.b16 %v473
        %v570 = vunpack.c.l.b16 %v474
        %v571 = vunpack.c.l.b16 %v475
        %v572 = vunpack.c.l.b16 %v476
        %v573 = vunpack.c.l.b16 %v477
        %v574 = vunpack.c.l.b16 %v478
        %v575 = vunpack.c.l.b16 %v479
        %v576 = vunpack.c.l.b16 %v480
        %v577 = vunpack.c.l.b16 %v481
        %v578 = vunpack.c.l.b16 %v482
        %v579 = vunpack.c.l.b16 %v483
        %v580 = vunpack.c.l.b16 %v484
        %v581 = vunpack.c.l.b16 %v485
        %v582 = vunpack.c.l.b16 %v486
        %v583 = vunpack.c.l.b16 %v487
        %v584 = vunpack.c.l.b16 %v488
        %v585 = vunpack.c.l.b16 %v489
        %v586 = vunpack.c.l.b16 %v490
        %v587 = vunpack.c.l.b16 %v491
        %v588 = vunpack.c.l.b16 %v492
        %v589 = vunpack.c.l.b16 %v493
        %v590 = vunpack.c.l.b16 %v494
        %v591 = vunpack.c.l.b16 %v495
        %v592 = vunpack.c.l.b16 %v496
        %v593 = vunpack.c.l.b16 %v497
        %v594 = vunpack.c.l.b16 %v498
        %v595 = vunpack.c.l.b16 %v499
        %v596 = vunpack.c.l.b16 %v500
        %v597 = vunpack.c.l.b16 %v501
        %v598 = vunpack.c.l.b16 %v502
        %v599 = vunpack.c.l.b16 %v503
        %v600 = vunpack.c.l.b16 %v504
        %v601 = vunpack.c.l.b16 %v505
        %v602 = vunpack.c.l.b16 %v506
        %v603 = vunpack.c.l.b16 %v507
        %v604 = vunpack.c.l.b16 %v508
        %v605 = vunpack.c.l.b16 %v509
        %v606 = vunpack.c.l.b16 %v510
        %v607 = vunpack.c.l.b16 %v511
        %v608 = vunpack.c.l.b16 %v512
        %v609 = vunpack.c.l.b16 %v513
        %v610 = vunpack.c.l.b16 %v514
        %v611 = vunpack.c.l.b16 %v515
        %v612 = vunpack.c.l.b16 %v516
        %v613 = vunpack.c.l.b16 %v517
        %v614 = vunpack.c.l.b16 %v518
        %v615 = vpack.c.b16 %v568, %v567
        %v616 = vpack.c.b16 %v570, %v569
        %v617 = vpack.c.b16 %v572, %v571
        %v618 = vpack.c.b16 %v574, %v573
        %v619 = vpack.c.b16 %v576, %v575
        %v620 = vpack.c.b16 %v578, %v577
        %v621 = vpack.c.b16 %v580, %v579
        %v622 = vpack.c.b16 %v582, %v581
        %v623 = vpack.c.b16 %v584, %v583
        %v624 = vpack.c.b16 %v586, %v585
        %v625 = vpack.c.b16 %v588, %v587
        %v626 = vpack.c.b16 %v590, %v589
        %v627 = vpack.c.b16 %v592, %v591
        %v628 = vpack.c.b16 %v594, %v593
        %v629 = vpack.c.b16 %v596, %v595
        %v630 = vpack.c.b16 %v598, %v597
        %v631 = vpack.c.b16 %v600, %v599
        %v632 = vpack.c.b16 %v602, %v601
        %v633 = vpack.c.b16 %v604, %v603
        %v634 = vpack.c.b16 %v606, %v605
        %v635 = vpack.c.b16 %v608, %v607
        %v636 = vpack.c.b16 %v610, %v609
        %v637 = vpack.c.b16 %v612, %v611
        %v638 = vpack.c.b16 %v614, %v613
        %663 = vmatprep.subr.bf16.mxu0 0
        %664 = vmatpush1.bf16.msra.mxu0 %v615
        %665 = vmatprep.subr.bf16.mxu0 0
        %666 = vmatpush1.bf16.msra.mxu0 %v616
        %667 = vmatprep.subr.bf16.mxu0 0
        %668 = vmatpush1.bf16.msra.mxu0 %v617
        %669 = vmatprep.subr.bf16.mxu0 0
        %670 = vmatpush1.bf16.msra.mxu0 %v618
        %671 = vmatprep.subr.bf16.mxu0 0
        %672 = vmatpush1.bf16.msra.mxu0 %v619
        %673 = vmatprep.subr.bf16.mxu0 0
        %674 = vmatpush1.bf16.msra.mxu0 %v620
        %675 = vmatprep.subr.bf16.mxu0 0
        %676 = vmatpush1.bf16.msra.mxu0 %v621
        %677 = vmatprep.subr.bf16.mxu0 0
        %678 = vmatpush1.bf16.msra.mxu0 %v622
        %679 = vmatprep.subr.bf16.mxu0 0
        %680 = vmatpush1.bf16.msra.mxu0 %v623
        %681 = vmatprep.subr.bf16.mxu0 0
        %682 = vmatpush1.bf16.msra.mxu0 %v624
        %683 = vmatprep.subr.bf16.mxu0 0
        %684 = vmatpush1.bf16.msra.mxu0 %v625
        %685 = vmatprep.subr.bf16.mxu0 0
        %686 = vmatpush1.bf16.msra.mxu0 %v626
        %687 = vmatprep.subr.bf16.mxu0 0
        %688 = vmatpush1.bf16.msra.mxu0 %v627
        %689 = vmatprep.subr.bf16.mxu0 0
        %690 = vmatpush1.bf16.msra.mxu0 %v628
        %691 = vmatprep.subr.bf16.mxu0 0
        %692 = vmatpush1.bf16.msra.mxu0 %v629
        %693 = vmatprep.subr.bf16.mxu0 0
        %694 = vmatpush1.bf16.msra.mxu0 %v630
        %695 = vmatprep.mubr.bf16.mxu0 %v374
        %696 = vmatmul.mubr.bf16.gmra.mrb[0].mxu0 %v331
        %v697 = vpop.f32.mrb[0].mxu0
        %v698 = vadd.f32 0.0, %v697
        %v699 = vpop.f32.mrb[0].mxu0
        %v700 = vpop.f32.mrb[0].mxu0
        %v701 = vadd.f32 0.0, %v700
        %v702 = vpop.f32.mrb[0].mxu0
        %703 = vmatprep.mubr.bf16.mxu0 %v375
        %704 = vmatmul.mubr.bf16.gmra.mrb[0].mxu0 %v332
        %v705 = vpop.f32.mrb[0].mxu0
        %v706 = vadd.f32 0.0, %v705
        %v707 = vpop.f32.mrb[0].mxu0
        %v708 = vpop.f32.mrb[0].mxu0
        %v709 = vadd.f32 0.0, %v708
        %v710 = vpop.f32.mrb[0].mxu0
        %711 = vmatprep.mubr.bf16.mxu0 %v376
        %712 = vmatmul.mubr.bf16.gmra.mrb[0].mxu0 %v333
        %v713 = vpop.f32.mrb[0].mxu0
        %v714 = vadd.f32 0.0, %v713
        %v715 = vpop.f32.mrb[0].mxu0
        %v716 = vpop.f32.mrb[0].mxu0
        %v717 = vadd.f32 0.0, %v716
        %v718 = vpop.f32.mrb[0].mxu0
        %719 = vmatprep.mubr.bf16.mxu0 %v377
        %720 = vmatmul.mubr.bf16.gmra.mrb[0].mxu0 %v334
        %v721 = vpop.f32.mrb[0].mxu0
        %v722 = vadd.f32 0.0, %v721
        %v723 = vpop.f32.mrb[0].mxu0
        %v724 = vpop.f32.mrb[0].mxu0
        %v725 = vadd.f32 0.0, %v724
        %v726 = vpop.f32.mrb[0].mxu0
        %727 = vmatprep.mubr.bf16.mxu0 %v378
        %728 = vmatmul.mubr.bf16.gmra.mrb[0].mxu0 %v335
        %v729 = vpop.f32.mrb[0].mxu0
        %v730 = vadd.f32 0.0, %v729
        %v731 = vpop.f32.mrb[0].mxu0
        %v732 = vpop.f32.mrb[0].mxu0
        %v733 = vadd.f32 0.0, %v732
        %v734 = vpop.f32.mrb[0].mxu0
        %735 = vmatprep.mubr.bf16.mxu0 %v379
        %736 = vmatmul.mubr.bf16.gmra.mrb[0].mxu0 %v336
        %v737 = vpop.f32.mrb[0].mxu0
        %v738 = vadd.f32 0.0, %v737
        %v739 = vpop.f32.mrb[0].mxu0
        %v740 = vpop.f32.mrb[0].mxu0
        %v741 = vadd.f32 0.0, %v740
        %v742 = vpop.f32.mrb[0].mxu0
        %743 = vdwg.mxu0
        %744 = vmatprep.subr.bf16.mxu0 0
        %745 = vmatpush1.bf16.msra.mxu0 %v631
        %746 = vmatprep.subr.bf16.mxu0 0
        %747 = vmatpush1.bf16.msra.mxu0 %v632
        %748 = vmatprep.subr.bf16.mxu0 0
        %749 = vmatpush1.bf16.msra.mxu0 %v633
        %750 = vmatprep.subr.bf16.mxu0 0
        %751 = vmatpush1.bf16.msra.mxu0 %v634
        %752 = vmatprep.subr.bf16.mxu0 0
        %753 = vmatpush1.bf16.msra.mxu0 %v635
        %754 = vmatprep.subr.bf16.mxu0 0
        %755 = vmatpush1.bf16.msra.mxu0 %v636
        %756 = vmatprep.subr.bf16.mxu0 0
        %757 = vmatpush1.bf16.msra.mxu0 %v637
        %758 = vmatprep.subr.bf16.mxu0 0
        %759 = vmatpush1.bf16.msra.mxu0 %v638
        %760 = vmatprep.subr.bf16.mxu0 0
        %761 = vmatpush1.bf16.msra.mxu0 0
        %762 = vmatprep.subr.bf16.mxu0 0
        %763 = vmatpush1.bf16.msra.mxu0 0
        %764 = vmatprep.subr.bf16.mxu0 0
        %765 = vmatpush1.bf16.msra.mxu0 0
        %766 = vmatprep.subr.bf16.mxu0 0
        %767 = vmatpush1.bf16.msra.mxu0 0
        %768 = vmatprep.subr.bf16.mxu0 0
        %769 = vmatpush1.bf16.msra.mxu0 0
        %770 = vmatprep.subr.bf16.mxu0 0
        %771 = vmatpush1.bf16.msra.mxu0 0
        %772 = vmatprep.subr.bf16.mxu0 0
        %773 = vmatpush1.bf16.msra.mxu0 0
        %774 = vmatprep.subr.bf16.mxu0 0
        %775 = vmatpush1.bf16.msra.mxu0 0
        %776 = vmatprep.mubr.bf16.mxu0 0
        %777 = vmatmul.mubr.bf16.gmra.mrb[0].mxu0 %v415
        %v778 = vpop.f32.mrb[0].mxu0
        %v779 = vadd.f32 %v698, %v778
        %v780 = vpop.f32.mrb[0].mxu0
        %v781 = vpop.f32.mrb[0].mxu0
        %v782 = vadd.f32 %v701, %v781
        %v783 = vpop.f32.mrb[0].mxu0
        %784 = vmatprep.mubr.bf16.mxu0 0
        %785 = vmatmul.mubr.bf16.gmra.mrb[0].mxu0 %v416
        %v786 = vpop.f32.mrb[0].mxu0
        %v787 = vadd.f32 %v706, %v786
        %v788 = vpop.f32.mrb[0].mxu0
        %v789 = vpop.f32.mrb[0].mxu0
        %v790 = vadd.f32 %v709, %v789
        %v791 = vpop.f32.mrb[0].mxu0
        %792 = vmatprep.mubr.bf16.mxu0 0
        %793 = vmatmul.mubr.bf16.gmra.mrb[0].mxu0 %v417
        %v794 = vpop.f32.mrb[0].mxu0
        %v795 = vadd.f32 %v714, %v794
        %v796 = vpop.f32.mrb[0].mxu0
        %v797 = vpop.f32.mrb[0].mxu0
        %v798 = vadd.f32 %v717, %v797
        %v799 = vpop.f32.mrb[0].mxu0
        %800 = vmatprep.mubr.bf16.mxu0 0
        %801 = vmatmul.mubr.bf16.gmra.mrb[0].mxu0 %v418
        %v802 = vpop.f32.mrb[0].mxu0
        %v803 = vadd.f32 %v722, %v802
        %v804 = vpop.f32.mrb[0].mxu0
        %v805 = vpop.f32.mrb[0].mxu0
        %v806 = vadd.f32 %v725, %v805
        %v807 = vpop.f32.mrb[0].mxu0
        %808 = vmatprep.mubr.bf16.mxu0 0
        %809 = vmatmul.mubr.bf16.gmra.mrb[0].mxu0 %v419
        %v810 = vpop.f32.mrb[0].mxu0
        %v811 = vadd.f32 %v730, %v810
        %v812 = vpop.f32.mrb[0].mxu0
        %v813 = vpop.f32.mrb[0].mxu0
        %v814 = vadd.f32 %v733, %v813
        %v815 = vpop.f32.mrb[0].mxu0
        %816 = vmatprep.mubr.bf16.mxu0 0
        %817 = vmatmul.mubr.bf16.gmra.mrb[0].mxu0 %v420
        %v818 = vpop.f32.mrb[0].mxu0
        %v819 = vadd.f32 %v738, %v818
        %v820 = vpop.f32.mrb[0].mxu0
        %v821 = vpop.f32.mrb[0].mxu0
        %v822 = vadd.f32 %v741, %v821
        %v823 = vpop.f32.mrb[0].mxu0
        %824 = vdwg.mxu0
        %v873 = vunpack.c.l.b16 %v422
        %v874 = vunpack.c.l.b16 %v423
        %v875 = vunpack.c.l.b16 %v424
        %v876 = vunpack.c.l.b16 %v425
        %v877 = vunpack.c.l.b16 %v426
        %v878 = vunpack.c.l.b16 %v427
        %v879 = vunpack.c.l.b16 %v428
        %v880 = vunpack.c.l.b16 %v429
        %v881 = vunpack.c.l.b16 %v430
        %v882 = vunpack.c.l.b16 %v431
        %v883 = vunpack.c.l.b16 %v432
        %v884 = vunpack.c.l.b16 %v433
        %v885 = vunpack.c.l.b16 %v434
        %v886 = vunpack.c.l.b16 %v435
        %v887 = vunpack.c.l.b16 %v436
        %v888 = vunpack.c.l.b16 %v437
        %v889 = vunpack.c.l.b16 %v438
        %v890 = vunpack.c.l.b16 %v439
        %v891 = vunpack.c.l.b16 %v440
        %v892 = vunpack.c.l.b16 %v441
        %v893 = vunpack.c.l.b16 %v442
        %v894 = vunpack.c.l.b16 %v443
        %v895 = vunpack.c.l.b16 %v444
        %v896 = vunpack.c.l.b16 %v445
        %v897 = vunpack.c.l.b16 %v446
        %v898 = vunpack.c.l.b16 %v447
        %v899 = vunpack.c.l.b16 %v448
        %v900 = vunpack.c.l.b16 %v449
        %v901 = vunpack.c.l.b16 %v450
        %v902 = vunpack.c.l.b16 %v451
        %v903 = vunpack.c.l.b16 %v452
        %v904 = vunpack.c.l.b16 %v453
        %v905 = vunpack.c.l.b16 %v454
        %v906 = vunpack.c.l.b16 %v455
        %v907 = vunpack.c.l.b16 %v456
        %v908 = vunpack.c.l.b16 %v457
        %v909 = vunpack.c.l.b16 %v458
        %v910 = vunpack.c.l.b16 %v459
        %v911 = vunpack.c.l.b16 %v460
        %v912 = vunpack.c.l.b16 %v461
        %v913 = vunpack.c.l.b16 %v462
        %v914 = vunpack.c.l.b16 %v463
        %v915 = vunpack.c.l.b16 %v464
        %v916 = vunpack.c.l.b16 %v465
        %v917 = vunpack.c.l.b16 %v466
        %v918 = vunpack.c.l.b16 %v467
        %v919 = vunpack.c.l.b16 %v468
        %v920 = vunpack.c.l.b16 %v469
        %v921 = vpack.c.b16 %v874, %v873
        %v922 = vpack.c.b16 %v876, %v875
        %v923 = vpack.c.b16 %v878, %v877
        %v924 = vpack.c.b16 %v880, %v879
        %v925 = vpack.c.b16 %v882, %v881
        %v926 = vpack.c.b16 %v884, %v883
        %v927 = vpack.c.b16 %v886, %v885
        %v928 = vpack.c.b16 %v888, %v887
        %v929 = vpack.c.b16 %v890, %v889
        %v930 = vpack.c.b16 %v892, %v891
        %v931 = vpack.c.b16 %v894, %v893
        %v932 = vpack.c.b16 %v896, %v895
        %v933 = vpack.c.b16 %v898, %v897
        %v934 = vpack.c.b16 %v900, %v899
        %v935 = vpack.c.b16 %v902, %v901
        %v936 = vpack.c.b16 %v904, %v903
        %v937 = vpack.c.b16 %v906, %v905
        %v938 = vpack.c.b16 %v908, %v907
        %v939 = vpack.c.b16 %v910, %v909
        %v940 = vpack.c.b16 %v912, %v911
        %v941 = vpack.c.b16 %v914, %v913
        %v942 = vpack.c.b16 %v916, %v915
        %v943 = vpack.c.b16 %v918, %v917
        %v944 = vpack.c.b16 %v920, %v919
        %969 = vmatprep.subr.bf16.mxu0 0
        %970 = vmatpush1.bf16.msra.mxu0 %v921
        %971 = vmatprep.subr.bf16.mxu0 0
        %972 = vmatpush1.bf16.msra.mxu0 %v922
        %973 = vmatprep.subr.bf16.mxu0 0
        %974 = vmatpush1.bf16.msra.mxu0 %v923
        %975 = vmatprep.subr.bf16.mxu0 0
        %976 = vmatpush1.bf16.msra.mxu0 %v924
        %977 = vmatprep.subr.bf16.mxu0 0
        %978 = vmatpush1.bf16.msra.mxu0 %v925
        %979 = vmatprep.subr.bf16.mxu0 0
        %980 = vmatpush1.bf16.msra.mxu0 %v926
        %981 = vmatprep.subr.bf16.mxu0 0
        %982 = vmatpush1.bf16.msra.mxu0 %v927
        %983 = vmatprep.subr.bf16.mxu0 0
        %984 = vmatpush1.bf16.msra.mxu0 %v928
        %985 = vmatprep.subr.bf16.mxu0 0
        %986 = vmatpush1.bf16.msra.mxu0 %v929
        %987 = vmatprep.subr.bf16.mxu0 0
        %988 = vmatpush1.bf16.msra.mxu0 %v930
        %989 = vmatprep.subr.bf16.mxu0 0
        %990 = vmatpush1.bf16.msra.mxu0 %v931
        %991 = vmatprep.subr.bf16.mxu0 0
        %992 = vmatpush1.bf16.msra.mxu0 %v932
        %993 = vmatprep.subr.bf16.mxu0 0
        %994 = vmatpush1.bf16.msra.mxu0 %v933
        %995 = vmatprep.subr.bf16.mxu0 0
        %996 = vmatpush1.bf16.msra.mxu0 %v934
        %997 = vmatprep.subr.bf16.mxu0 0
        %998 = vmatpush1.bf16.msra.mxu0 %v935
        %999 = vmatprep.subr.bf16.mxu0 0
        %1000 = vmatpush1.bf16.msra.mxu0 %v936
        %1001 = vmatprep.mubr.bf16.mxu0 %v373
        %1002 = vmatmul.mubr.bf16.gmra.mrb[0].mxu0 %v330
        %v1003 = vpop.f32.mrb[0].mxu0
        %v1004 = vadd.f32 %v779, %v1003
        %v1005 = vpop.f32.mrb[0].mxu0
        %v1006 = vpop.f32.mrb[0].mxu0
        %v1007 = vadd.f32 %v782, %v1006
        %v1008 = vpop.f32.mrb[0].mxu0
        %1009 = vmatprep.mubr.bf16.mxu0 %v374
        %1010 = vmatmul.mubr.bf16.gmra.mrb[0].mxu0 %v331
        %v1011 = vpop.f32.mrb[0].mxu0
        %v1012 = vadd.f32 %v787, %v1011
        %v1013 = vpop.f32.mrb[0].mxu0
        %v1014 = vpop.f32.mrb[0].mxu0
        %v1015 = vadd.f32 %v790, %v1014
        %v1016 = vpop.f32.mrb[0].mxu0
        %1017 = vmatprep.mubr.bf16.mxu0 %v375
        %1018 = vmatmul.mubr.bf16.gmra.mrb[0].mxu0 %v332
        %v1019 = vpop.f32.mrb[0].mxu0
        %v1020 = vadd.f32 %v795, %v1019
        %v1021 = vpop.f32.mrb[0].mxu0
        %v1022 = vpop.f32.mrb[0].mxu0
        %v1023 = vadd.f32 %v798, %v1022
        %v1024 = vpop.f32.mrb[0].mxu0
        %1025 = vmatprep.mubr.bf16.mxu0 %v376
        %1026 = vmatmul.mubr.bf16.gmra.mrb[0].mxu0 %v333
        %v1027 = vpop.f32.mrb[0].mxu0
        %v1028 = vadd.f32 %v803, %v1027
        %v1029 = vpop.f32.mrb[0].mxu0
        %v1030 = vpop.f32.mrb[0].mxu0
        %v1031 = vadd.f32 %v806, %v1030
        %v1032 = vpop.f32.mrb[0].mxu0
        %1033 = vmatprep.mubr.bf16.mxu0 %v377
        %1034 = vmatmul.mubr.bf16.gmra.mrb[0].mxu0 %v334
        %v1035 = vpop.f32.mrb[0].mxu0
        %v1036 = vadd.f32 %v811, %v1035
        %v1037 = vpop.f32.mrb[0].mxu0
        %v1038 = vpop.f32.mrb[0].mxu0
        %v1039 = vadd.f32 %v814, %v1038
        %v1040 = vpop.f32.mrb[0].mxu0
        %1041 = vmatprep.mubr.bf16.mxu0 %v378
        %1042 = vmatmul.mubr.bf16.gmra.mrb[0].mxu0 %v335
        %v1043 = vpop.f32.mrb[0].mxu0
        %v1044 = vadd.f32 %v819, %v1043
        %v1045 = vpop.f32.mrb[0].mxu0
        %v1046 = vpop.f32.mrb[0].mxu0
        %v1047 = vadd.f32 %v822, %v1046
        %v1048 = vpop.f32.mrb[0].mxu0
        %1049 = vdwg.mxu0
        %1050 = vmatprep.subr.bf16.mxu0 0
        %1051 = vmatpush1.bf16.msra.mxu0 %v937
        %1052 = vmatprep.subr.bf16.mxu0 0
        %1053 = vmatpush1.bf16.msra.mxu0 %v938
        %1054 = vmatprep.subr.bf16.mxu0 0
        %1055 = vmatpush1.bf16.msra.mxu0 %v939
        %1056 = vmatprep.subr.bf16.mxu0 0
        %1057 = vmatpush1.bf16.msra.mxu0 %v940
        %1058 = vmatprep.subr.bf16.mxu0 0
        %1059 = vmatpush1.bf16.msra.mxu0 %v941
        %1060 = vmatprep.subr.bf16.mxu0 0
        %1061 = vmatpush1.bf16.msra.mxu0 %v942
        %1062 = vmatprep.subr.bf16.mxu0 0
        %1063 = vmatpush1.bf16.msra.mxu0 %v943
        %1064 = vmatprep.subr.bf16.mxu0 0
        %1065 = vmatpush1.bf16.msra.mxu0 %v944
        %1066 = vmatprep.subr.bf16.mxu0 0
        %1067 = vmatpush1.bf16.msra.mxu0 0
        %1068 = vmatprep.subr.bf16.mxu0 0
        %1069 = vmatpush1.bf16.msra.mxu0 0
        %1070 = vmatprep.subr.bf16.mxu0 0
        %1071 = vmatpush1.bf16.msra.mxu0 0
        %1072 = vmatprep.subr.bf16.mxu0 0
        %1073 = vmatpush1.bf16.msra.mxu0 0
        %1074 = vmatprep.subr.bf16.mxu0 0
        %1075 = vmatpush1.bf16.msra.mxu0 0
        %1076 = vmatprep.subr.bf16.mxu0 0
        %1077 = vmatpush1.bf16.msra.mxu0 0
        %1078 = vmatprep.subr.bf16.mxu0 0
        %1079 = vmatpush1.bf16.msra.mxu0 0
        %1080 = vmatprep.subr.bf16.mxu0 0
        %1081 = vmatpush1.bf16.msra.mxu0 0
        %1082 = vmatprep.mubr.bf16.mxu0 0
        %1083 = vmatmul.mubr.bf16.gmra.mrb[0].mxu0 %v414
        %v1084 = vpop.f32.mrb[0].mxu0
        %v1085 = vadd.f32 %v1004, %v1084
        %v1086 = vpop.f32.mrb[0].mxu0
        %v1087 = vpop.f32.mrb[0].mxu0
        %v1088 = vadd.f32 %v1007, %v1087
        %v1089 = vpop.f32.mrb[0].mxu0
        %1090 = vmatprep.mubr.bf16.mxu0 0
        %1091 = vmatmul.mubr.bf16.gmra.mrb[0].mxu0 %v415
        %v1092 = vpop.f32.mrb[0].mxu0
        %v1093 = vadd.f32 %v1012, %v1092
        %v1094 = vpop.f32.mrb[0].mxu0
        %v1095 = vpop.f32.mrb[0].mxu0
        %v1096 = vadd.f32 %v1015, %v1095
        %v1097 = vpop.f32.mrb[0].mxu0
        %1098 = vmatprep.mubr.bf16.mxu0 0
        %1099 = vmatmul.mubr.bf16.gmra.mrb[0].mxu0 %v416
        %v1100 = vpop.f32.mrb[0].mxu0
        %v1101 = vadd.f32 %v1020, %v1100
        %v1102 = vpop.f32.mrb[0].mxu0
        %v1103 = vpop.f32.mrb[0].mxu0
        %v1104 = vadd.f32 %v1023, %v1103
        %v1105 = vpop.f32.mrb[0].mxu0
        %1106 = vmatprep.mubr.bf16.mxu0 0
        %1107 = vmatmul.mubr.bf16.gmra.mrb[0].mxu0 %v417
        %v1108 = vpop.f32.mrb[0].mxu0
        %v1109 = vadd.f32 %v1028, %v1108
        %v1110 = vpop.f32.mrb[0].mxu0
        %v1111 = vpop.f32.mrb[0].mxu0
        %v1112 = vadd.f32 %v1031, %v1111
        %v1113 = vpop.f32.mrb[0].mxu0
        %1114 = vmatprep.mubr.bf16.mxu0 0
        %1115 = vmatmul.mubr.bf16.gmra.mrb[0].mxu0 %v418
        %v1116 = vpop.f32.mrb[0].mxu0
        %v1117 = vadd.f32 %v1036, %v1116
        %v1118 = vpop.f32.mrb[0].mxu0
        %v1119 = vpop.f32.mrb[0].mxu0
        %v1120 = vadd.f32 %v1039, %v1119
        %v1121 = vpop.f32.mrb[0].mxu0
        %1122 = vmatprep.mubr.bf16.mxu0 0
        %1123 = vmatmul.mubr.bf16.gmra.mrb[0].mxu0 %v419
        %v1124 = vpop.f32.mrb[0].mxu0
        %v1125 = vadd.f32 %v1044, %v1124
        %v1126 = vpop.f32.mrb[0].mxu0
        %v1127 = vpop.f32.mrb[0].mxu0
        %v1128 = vadd.f32 %v1047, %v1127
        %v1129 = vpop.f32.mrb[0].mxu0
        %1130 = vdwg.mxu0
        %s1131 = scalar_lea.vmem [#allocation4], 384
        %v1132 = vld [vmem:[%s1131] sm:$0xf]
        %v1133 = vld [vmem:[%s1131 + $0x4] sm:$0xf]
        %v1134 = vld [vmem:[%s1131 + $0x8] sm:$0xf]
        %v1135 = vld [vmem:[%s1131 + $0xc] sm:$0xf]
        %v1136 = vld [vmem:[%s1131 + $0x10] sm:$0xf]
        %v1137 = vld [vmem:[%s1131 + $0x14] sm:$0xf]
        %v1138 = vld [vmem:[%s1131 + $0x18] sm:$0xf]
        %v1139 = vld [vmem:[%s1131 + $0x1c] sm:$0xf]
        %v1140 = vld [vmem:[%s1131 + $0x20] sm:$0xf]
        %v1141 = vld [vmem:[%s1131 + $0x24] sm:$0xf]
        %v1142 = vld [vmem:[%s1131 + $0x28] sm:$0xf]
        %v1143 = vld [vmem:[%s1131 + $0x2c] sm:$0xf]
        %v1144 = vld [vmem:[%s1131 + $0x30] sm:$0xf]
        %v1145 = vld [vmem:[%s1131 + $0x34] sm:$0xf]
        %v1146 = vld [vmem:[%s1131 + $0x38] sm:$0xf]
        %v1147 = vld [vmem:[%s1131 + $0x3c] sm:$0xf]
        %v1148 = vld [vmem:[%s1131 + $0x40] sm:$0xf]
        %v1149 = vld [vmem:[%s1131 + $0x44] sm:$0xf]
        %v1150 = vld [vmem:[%s1131 + $0x48] sm:$0xf]
        %v1151 = vld [vmem:[%s1131 + $0x4c] sm:$0xf]
        %v1152 = vld [vmem:[%s1131 + $0x50] sm:$0xf]
        %v1153 = vld [vmem:[%s1131 + $0x54] sm:$0xf]
        %v1154 = vld [vmem:[%s1131 + $0x58] sm:$0xf]
        %v1155 = vld [vmem:[%s1131 + $0x5c] sm:$0xf]
        %v1156 = vld [vmem:[%s1131 + $0x60] sm:$0xf]
        %v1157 = vld [vmem:[%s1131 + $0x64] sm:$0xf]
        %v1158 = vld [vmem:[%s1131 + $0x68] sm:$0xf]
        %v1159 = vld [vmem:[%s1131 + $0x6c] sm:$0xf]
        %v1160 = vld [vmem:[%s1131 + $0x70] sm:$0xf]
        %v1161 = vld [vmem:[%s1131 + $0x74] sm:$0xf]
        %v1162 = vld [vmem:[%s1131 + $0x78] sm:$0xf]
        %v1163 = vld [vmem:[%s1131 + $0x7c] sm:$0xf]
        %v1164 = vld [vmem:[%s1131 + $0x80] sm:$0xf]
        %v1165 = vld [vmem:[%s1131 + $0x84] sm:$0xf]
        %v1166 = vld [vmem:[%s1131 + $0x88] sm:$0xf]
        %v1167 = vld [vmem:[%s1131 + $0x8c] sm:$0xf]
        %v1168 = vld [vmem:[%s1131 + $0x90] sm:$0xf]
        %v1169 = vld [vmem:[%s1131 + $0x94] sm:$0xf]
        %v1170 = vld [vmem:[%s1131 + $0x98] sm:$0xf]
        %v1171 = vld [vmem:[%s1131 + $0x9c] sm:$0xf]
        %v1172 = vld [vmem:[%s1131 + $0xa0] sm:$0xf]
        %v1173 = vld [vmem:[%s1131 + $0xa4] sm:$0xf]
        %v1174 = vld [vmem:[%s1131 + $0xa8] sm:$0xf]
        %v1175 = vld [vmem:[%s1131 + $0xac] sm:$0xf]
        %v1176 = vld [vmem:[%s1131 + $0xb0] sm:$0xf]
        %v1177 = vld [vmem:[%s1131 + $0xb4] sm:$0xf]
        %v1178 = vld [vmem:[%s1131 + $0xb8] sm:$0xf]
        %v1179 = vld [vmem:[%s1131 + $0xbc] sm:$0xf]
        %v1228 = vunpack.c.l.b16 %v1132
        %v1229 = vunpack.c.l.b16 %v1133
        %v1230 = vunpack.c.l.b16 %v1134
        %v1231 = vunpack.c.l.b16 %v1135
        %v1232 = vunpack.c.l.b16 %v1136
        %v1233 = vunpack.c.l.b16 %v1137
        %v1234 = vunpack.c.l.b16 %v1138
        %v1235 = vunpack.c.l.b16 %v1139
        %v1236 = vunpack.c.l.b16 %v1140
        %v1237 = vunpack.c.l.b16 %v1141
        %v1238 = vunpack.c.l.b16 %v1142
        %v1239 = vunpack.c.l.b16 %v1143
        %v1240 = vunpack.c.l.b16 %v1144
        %v1241 = vunpack.c.l.b16 %v1145
        %v1242 = vunpack.c.l.b16 %v1146
        %v1243 = vunpack.c.l.b16 %v1147
        %v1244 = vunpack.c.l.b16 %v1148
        %v1245 = vunpack.c.l.b16 %v1149
        %v1246 = vunpack.c.l.b16 %v1150
        %v1247 = vunpack.c.l.b16 %v1151
        %v1248 = vunpack.c.l.b16 %v1152
        %v1249 = vunpack.c.l.b16 %v1153
        %v1250 = vunpack.c.l.b16 %v1154
        %v1251 = vunpack.c.l.b16 %v1155
        %v1252 = vunpack.c.l.b16 %v1156
        %v1253 = vunpack.c.l.b16 %v1157
        %v1254 = vunpack.c.l.b16 %v1158
        %v1255 = vunpack.c.l.b16 %v1159
        %v1256 = vunpack.c.l.b16 %v1160
        %v1257 = vunpack.c.l.b16 %v1161
        %v1258 = vunpack.c.l.b16 %v1162
        %v1259 = vunpack.c.l.b16 %v1163
        %v1260 = vunpack.c.l.b16 %v1164
        %v1261 = vunpack.c.l.b16 %v1165
        %v1262 = vunpack.c.l.b16 %v1166
        %v1263 = vunpack.c.l.b16 %v1167
        %v1264 = vunpack.c.l.b16 %v1168
        %v1265 = vunpack.c.l.b16 %v1169
        %v1266 = vunpack.c.l.b16 %v1170
        %v1267 = vunpack.c.l.b16 %v1171
        %v1268 = vunpack.c.l.b16 %v1172
        %v1269 = vunpack.c.l.b16 %v1173
        %v1270 = vunpack.c.l.b16 %v1174
        %v1271 = vunpack.c.l.b16 %v1175
        %v1272 = vunpack.c.l.b16 %v1176
        %v1273 = vunpack.c.l.b16 %v1177
        %v1274 = vunpack.c.l.b16 %v1178
        %v1275 = vunpack.c.l.b16 %v1179
        %v1276 = vpack.c.b16 %v1229, %v1228
        %v1277 = vpack.c.b16 %v1231, %v1230
        %v1278 = vpack.c.b16 %v1233, %v1232
        %v1279 = vpack.c.b16 %v1235, %v1234
        %v1280 = vpack.c.b16 %v1237, %v1236
        %v1281 = vpack.c.b16 %v1239, %v1238
        %v1282 = vpack.c.b16 %v1241, %v1240
        %v1283 = vpack.c.b16 %v1243, %v1242
        %v1284 = vpack.c.b16 %v1245, %v1244
        %v1285 = vpack.c.b16 %v1247, %v1246
        %v1286 = vpack.c.b16 %v1249, %v1248
        %v1287 = vpack.c.b16 %v1251, %v1250
        %v1288 = vpack.c.b16 %v1253, %v1252
        %v1289 = vpack.c.b16 %v1255, %v1254
        %v1290 = vpack.c.b16 %v1257, %v1256
        %v1291 = vpack.c.b16 %v1259, %v1258
        %v1292 = vpack.c.b16 %v1261, %v1260
        %v1293 = vpack.c.b16 %v1263, %v1262
        %v1294 = vpack.c.b16 %v1265, %v1264
        %v1295 = vpack.c.b16 %v1267, %v1266
        %v1296 = vpack.c.b16 %v1269, %v1268
        %v1297 = vpack.c.b16 %v1271, %v1270
        %v1298 = vpack.c.b16 %v1273, %v1272
        %v1299 = vpack.c.b16 %v1275, %v1274
        %1324 = vmatprep.subr.bf16.mxu0 0
        %1325 = vmatpush1.bf16.msra.mxu0 %v1276
        %1326 = vmatprep.subr.bf16.mxu0 0
        %1327 = vmatpush1.bf16.msra.mxu0 %v1277
        %1328 = vmatprep.subr.bf16.mxu0 0
        %1329 = vmatpush1.bf16.msra.mxu0 %v1278
        %1330 = vmatprep.subr.bf16.mxu0 0
        %1331 = vmatpush1.bf16.msra.mxu0 %v1279
        %1332 = vmatprep.subr.bf16.mxu0 0
        %1333 = vmatpush1.bf16.msra.mxu0 %v1280
        %1334 = vmatprep.subr.bf16.mxu0 0
        %1335 = vmatpush1.bf16.msra.mxu0 %v1281
        %1336 = vmatprep.subr.bf16.mxu0 0
        %1337 = vmatpush1.bf16.msra.mxu0 %v1282
        %1338 = vmatprep.subr.bf16.mxu0 0
        %1339 = vmatpush1.bf16.msra.mxu0 %v1283
        %1340 = vmatprep.subr.bf16.mxu0 0
        %1341 = vmatpush1.bf16.msra.mxu0 %v1284
        %1342 = vmatprep.subr.bf16.mxu0 0
        %1343 = vmatpush1.bf16.msra.mxu0 %v1285
        %1344 = vmatprep.subr.bf16.mxu0 0
        %1345 = vmatpush1.bf16.msra.mxu0 %v1286
        %1346 = vmatprep.subr.bf16.mxu0 0
        %1347 = vmatpush1.bf16.msra.mxu0 %v1287
        %1348 = vmatprep.subr.bf16.mxu0 0
        %1349 = vmatpush1.bf16.msra.mxu0 %v1288
        %1350 = vmatprep.subr.bf16.mxu0 0
        %1351 = vmatpush1.bf16.msra.mxu0 %v1289
        %1352 = vmatprep.subr.bf16.mxu0 0
        %1353 = vmatpush1.bf16.msra.mxu0 %v1290
        %1354 = vmatprep.subr.bf16.mxu0 0
        %1355 = vmatpush1.bf16.msra.mxu0 %v1291
        %1356 = vmatprep.mubr.bf16.mxu0 %v375
        %1357 = vmatmul.mubr.bf16.gmra.mrb[0].mxu0 %v332
        %v1358 = vpop.f32.mrb[0].mxu0
        %v1359 = vadd.f32 0.0, %v1358
        %v1360 = vpop.f32.mrb[0].mxu0
        %v1361 = vpop.f32.mrb[0].mxu0
        %v1362 = vadd.f32 0.0, %v1361
        %v1363 = vpop.f32.mrb[0].mxu0
        %1364 = vmatprep.mubr.bf16.mxu0 %v376
        %1365 = vmatmul.mubr.bf16.gmra.mrb[0].mxu0 %v333
        %v1366 = vpop.f32.mrb[0].mxu0
        %v1367 = vadd.f32 0.0, %v1366
        %v1368 = vpop.f32.mrb[0].mxu0
        %v1369 = vpop.f32.mrb[0].mxu0
        %v1370 = vadd.f32 0.0, %v1369
        %v1371 = vpop.f32.mrb[0].mxu0
        %1372 = vmatprep.mubr.bf16.mxu0 %v377
        %1373 = vmatmul.mubr.bf16.gmra.mrb[0].mxu0 %v334
        %v1374 = vpop.f32.mrb[0].mxu0
        %v1375 = vadd.f32 0.0, %v1374
        %v1376 = vpop.f32.mrb[0].mxu0
        %v1377 = vpop.f32.mrb[0].mxu0
        %v1378 = vadd.f32 0.0, %v1377
        %v1379 = vpop.f32.mrb[0].mxu0
        %1380 = vmatprep.mubr.bf16.mxu0 %v378
        %1381 = vmatmul.mubr.bf16.gmra.mrb[0].mxu0 %v335
        %v1382 = vpop.f32.mrb[0].mxu0
        %v1383 = vadd.f32 0.0, %v1382
        %v1384 = vpop.f32.mrb[0].mxu0
        %v1385 = vpop.f32.mrb[0].mxu0
        %v1386 = vadd.f32 0.0, %v1385
        %v1387 = vpop.f32.mrb[0].mxu0
        %1388 = vmatprep.mubr.bf16.mxu0 %v379
        %1389 = vmatmul.mubr.bf16.gmra.mrb[0].mxu0 %v336
        %v1390 = vpop.f32.mrb[0].mxu0
        %v1391 = vadd.f32 0.0, %v1390
        %v1392 = vpop.f32.mrb[0].mxu0
        %v1393 = vpop.f32.mrb[0].mxu0
        %v1394 = vadd.f32 0.0, %v1393
        %v1395 = vpop.f32.mrb[0].mxu0
        %1396 = vmatprep.mubr.bf16.mxu0 %v380
        %1397 = vmatmul.mubr.bf16.gmra.mrb[0].mxu0 %v337
        %v1398 = vpop.f32.mrb[0].mxu0
        %v1399 = vadd.f32 0.0, %v1398
        %v1400 = vpop.f32.mrb[0].mxu0
        %v1401 = vpop.f32.mrb[0].mxu0
        %v1402 = vadd.f32 0.0, %v1401
        %v1403 = vpop.f32.mrb[0].mxu0
        %1404 = vdwg.mxu0
        %1405 = vmatprep.subr.bf16.mxu0 0
        %1406 = vmatpush1.bf16.msra.mxu0 %v1292
        %1407 = vmatprep.subr.bf16.mxu0 0
        %1408 = vmatpush1.bf16.msra.mxu0 %v1293
        %1409 = vmatprep.subr.bf16.mxu0 0
        %1410 = vmatpush1.bf16.msra.mxu0 %v1294
        %1411 = vmatprep.subr.bf16.mxu0 0
        %1412 = vmatpush1.bf16.msra.mxu0 %v1295
        %1413 = vmatprep.subr.bf16.mxu0 0
        %1414 = vmatpush1.bf16.msra.mxu0 %v1296
        %1415 = vmatprep.subr.bf16.mxu0 0
        %1416 = vmatpush1.bf16.msra.mxu0 %v1297
        %1417 = vmatprep.subr.bf16.mxu0 0
        %1418 = vmatpush1.bf16.msra.mxu0 %v1298
        %1419 = vmatprep.subr.bf16.mxu0 0
        %1420 = vmatpush1.bf16.msra.mxu0 %v1299
        %1421 = vmatprep.subr.bf16.mxu0 0
        %1422 = vmatpush1.bf16.msra.mxu0 0
        %1423 = vmatprep.subr.bf16.mxu0 0
        %1424 = vmatpush1.bf16.msra.mxu0 0
        %1425 = vmatprep.subr.bf16.mxu0 0
        %1426 = vmatpush1.bf16.msra.mxu0 0
        %1427 = vmatprep.subr.bf16.mxu0 0
        %1428 = vmatpush1.bf16.msra.mxu0 0
        %1429 = vmatprep.subr.bf16.mxu0 0
        %1430 = vmatpush1.bf16.msra.mxu0 0
        %1431 = vmatprep.subr.bf16.mxu0 0
        %1432 = vmatpush1.bf16.msra.mxu0 0
        %1433 = vmatprep.subr.bf16.mxu0 0
        %1434 = vmatpush1.bf16.msra.mxu0 0
        %1435 = vmatprep.subr.bf16.mxu0 0
        %1436 = vmatpush1.bf16.msra.mxu0 0
        %1437 = vmatprep.mubr.bf16.mxu0 0
        %1438 = vmatmul.mubr.bf16.gmra.mrb[0].mxu0 %v416
        %v1439 = vpop.f32.mrb[0].mxu0
        %v1440 = vadd.f32 %v1359, %v1439
        %v1441 = vpop.f32.mrb[0].mxu0
        %v1442 = vpop.f32.mrb[0].mxu0
        %v1443 = vadd.f32 %v1362, %v1442
        %v1444 = vpop.f32.mrb[0].mxu0
        %1445 = vmatprep.mubr.bf16.mxu0 0
        %1446 = vmatmul.mubr.bf16.gmra.mrb[0].mxu0 %v417
        %v1447 = vpop.f32.mrb[0].mxu0
        %v1448 = vadd.f32 %v1367, %v1447
        %v1449 = vpop.f32.mrb[0].mxu0
        %v1450 = vpop.f32.mrb[0].mxu0
        %v1451 = vadd.f32 %v1370, %v1450
        %v1452 = vpop.f32.mrb[0].mxu0
        %1453 = vmatprep.mubr.bf16.mxu0 0
        %1454 = vmatmul.mubr.bf16.gmra.mrb[0].mxu0 %v418
        %v1455 = vpop.f32.mrb[0].mxu0
        %v1456 = vadd.f32 %v1375, %v1455
        %v1457 = vpop.f32.mrb[0].mxu0
        %v1458 = vpop.f32.mrb[0].mxu0
        %v1459 = vadd.f32 %v1378, %v1458
        %v1460 = vpop.f32.mrb[0].mxu0
        %1461 = vmatprep.mubr.bf16.mxu0 0
        %1462 = vmatmul.mubr.bf16.gmra.mrb[0].mxu0 %v419
        %v1463 = vpop.f32.mrb[0].mxu0
        %v1464 = vadd.f32 %v1383, %v1463
        %v1465 = vpop.f32.mrb[0].mxu0
        %v1466 = vpop.f32.mrb[0].mxu0
        %v1467 = vadd.f32 %v1386, %v1466
        %v1468 = vpop.f32.mrb[0].mxu0
        %1469 = vmatprep.mubr.bf16.mxu0 0
        %1470 = vmatmul.mubr.bf16.gmra.mrb[0].mxu0 %v420
        %v1471 = vpop.f32.mrb[0].mxu0
        %v1472 = vadd.f32 %v1391, %v1471
        %v1473 = vpop.f32.mrb[0].mxu0
        %v1474 = vpop.f32.mrb[0].mxu0
        %v1475 = vadd.f32 %v1394, %v1474
        %v1476 = vpop.f32.mrb[0].mxu0
        %1477 = vmatprep.mubr.bf16.mxu0 0
        %1478 = vmatmul.mubr.bf16.gmra.mrb[0].mxu0 %v421
        %v1479 = vpop.f32.mrb[0].mxu0
        %v1480 = vadd.f32 %v1399, %v1479
        %v1481 = vpop.f32.mrb[0].mxu0
        %v1482 = vpop.f32.mrb[0].mxu0
        %v1483 = vadd.f32 %v1402, %v1482
        %v1484 = vpop.f32.mrb[0].mxu0
        %1485 = vdwg.mxu0
        %v1486 = vadd.f32 %v1085, %v1440
        %v1487 = vadd.f32 %v1088, %v1443
        %v1488 = vadd.f32 %v1093, %v1448
        %v1489 = vadd.f32 %v1096, %v1451
        %v1490 = vadd.f32 %v1101, %v1456
        %v1491 = vadd.f32 %v1104, %v1459
        %v1492 = vadd.f32 %v1109, %v1464
        %v1493 = vadd.f32 %v1112, %v1467
        %v1494 = vadd.f32 %v1117, %v1472
        %v1495 = vadd.f32 %v1120, %v1475
        %v1496 = vadd.f32 %v1125, %v1480
        %v1497 = vadd.f32 %v1128, %v1483
        %v1498 = vld [vmem:[#allocation7] sm:$0x1]
        %v1500 = vlaneseq
        %v1501 = vshrl.u32 %v1500, 7
        %v1502 = vsub.s32 0, %v1501
        %v1503 = vrot.slane %v1498, %v1502
        %v1505 = vadd.f32 %v1486, %v1503
        %v1506 = vadd.f32 %v1487, %v1503
        %v1507 = vadd.f32 %v1488, %v1503
        %v1508 = vadd.f32 %v1489, %v1503
        %v1509 = vadd.f32 %v1490, %v1503
        %v1510 = vadd.f32 %v1491, %v1503
        %v1511 = vadd.f32 %v1492, %v1503
        %v1512 = vadd.f32 %v1493, %v1503
        %v1513 = vadd.f32 %v1494, %v1503
        %v1514 = vadd.f32 %v1495, %v1503
        %v1515 = vadd.f32 %v1496, %v1503
        %v1516 = vadd.f32 %v1497, %v1503
        %v1517 = vmax.f32 %v1505, 0.0
        %v1518 = vmax.f32 %v1506, 0.0
        %v1519 = vmax.f32 %v1507, 0.0
        %v1520 = vmax.f32 %v1508, 0.0
        %v1521 = vmax.f32 %v1509, 0.0
        %v1522 = vmax.f32 %v1510, 0.0
        %v1523 = vmax.f32 %v1511, 0.0
        %v1524 = vmax.f32 %v1512, 0.0
        %v1525 = vmax.f32 %v1513, 0.0
        %v1526 = vmax.f32 %v1514, 0.0
        %v1527 = vmax.f32 %v1515, 0.0
        %v1528 = vmax.f32 %v1516, 0.0
        %v1529 = vpack.c.bf16 %v1518, %v1517
        %v1530 = vpack.c.bf16 %v1520, %v1519
        %v1531 = vpack.c.bf16 %v1522, %v1521
        %v1532 = vpack.c.bf16 %v1524, %v1523
        %v1533 = vpack.c.bf16 %v1526, %v1525
        %v1534 = vpack.c.bf16 %v1528, %v1527
        %v1535 = vrot.slane %v1517, 1
        %v1536 = vrot.slane %v1519, 1
        %v1537 = vrot.slane %v1521, 1
        %v1538 = vrot.slane %v1523, 1
        %v1539 = vrot.slane %v1525, 1
        %v1540 = vrot.slane %v1527, 1
        %v1541 = vrot.slane %v1518, 1
        %v1542 = vrot.slane %v1520, 1
        %v1543 = vrot.slane %v1522, 1
        %v1544 = vrot.slane %v1524, 1
        %v1545 = vrot.slane %v1526, 1
        %v1546 = vrot.slane %v1528, 1
        %v1547 = vsel %vm356, %v1535, %v1541
        %v1548 = vsel %vm356, %v1536, %v1542
        %v1549 = vsel %vm356, %v1537, %v1543
        %v1550 = vsel %vm356, %v1538, %v1544
        %v1551 = vsel %vm356, %v1539, %v1545
        %v1552 = vsel %vm356, %v1540, %v1546
        %v1553 = vsel %vm356, %v1541, %v1535
        %v1554 = vsel %vm356, %v1542, %v1536
        %v1555 = vsel %vm356, %v1543, %v1537
        %v1556 = vsel %vm356, %v1544, %v1538
        %v1557 = vsel %vm356, %v1545, %v1539
        %v1558 = vsel %vm356, %v1546, %v1540
        %v1559 = vpack.c.bf16 %v1553, %v1547
        %v1560 = vpack.c.bf16 %v1554, %v1548
        %v1561 = vpack.c.bf16 %v1555, %v1549
        %v1562 = vpack.c.bf16 %v1556, %v1550
        %v1563 = vpack.c.bf16 %v1557, %v1551
        %v1564 = vpack.c.bf16 %v1558, %v1552
        %v1565 = vrot.slane %v1517, 2
        %v1566 = vrot.slane %v1519, 2
        %v1567 = vrot.slane %v1521, 2
        %v1568 = vrot.slane %v1523, 2
        %v1569 = vrot.slane %v1525, 2
        %v1570 = vrot.slane %v1527, 2
        %v1571 = vrot.slane %v1518, 2
        %v1572 = vrot.slane %v1520, 2
        %v1573 = vrot.slane %v1522, 2
        %v1574 = vrot.slane %v1524, 2
        %v1575 = vrot.slane %v1526, 2
        %v1576 = vrot.slane %v1528, 2
        %v1577 = vsel %vm397, %v1565, %v1571
        %v1578 = vsel %vm397, %v1566, %v1572
        %v1579 = vsel %vm397, %v1567, %v1573
        %v1580 = vsel %vm397, %v1568, %v1574
        %v1581 = vsel %vm397, %v1569, %v1575
        %v1582 = vsel %vm397, %v1570, %v1576
        %v1583 = vsel %vm397, %v1571, %v1565
        %v1584 = vsel %vm397, %v1572, %v1566
        %v1585 = vsel %vm397, %v1573, %v1567
        %v1586 = vsel %vm397, %v1574, %v1568
        %v1587 = vsel %vm397, %v1575, %v1569
        %v1588 = vsel %vm397, %v1576, %v1570
        %v1589 = vpack.c.bf16 %v1583, %v1577
        %v1590 = vpack.c.bf16 %v1584, %v1578
        %v1591 = vpack.c.bf16 %v1585, %v1579
        %v1592 = vpack.c.bf16 %v1586, %v1580
        %v1593 = vpack.c.bf16 %v1587, %v1581
        %v1594 = vpack.c.bf16 %v1588, %v1582
        %v1595 = vld [vmem:[#allocation9] sm:$0xf]
        %v1596 = vld [vmem:[#allocation9 + $0x4] sm:$0xf]
        %v1597 = vld [vmem:[#allocation9 + $0x8] sm:$0xf]
        %v1598 = vld [vmem:[#allocation9 + $0xc] sm:$0xf]
        %v1599 = vld [vmem:[#allocation9 + $0x10] sm:$0xf]
        %v1600 = vld [vmem:[#allocation9 + $0x14] sm:$0xf]
        %v1601 = vld [vmem:[#allocation9 + $0x18] sm:$0xf]
        %v1602 = vld [vmem:[#allocation9 + $0x1c] sm:$0xf]
        %v1603 = vld [vmem:[#allocation9 + $0x20] sm:$0xf]
        %v1604 = vld [vmem:[#allocation9 + $0x24] sm:$0xf]
        %v1605 = vld [vmem:[#allocation9 + $0x28] sm:$0xf]
        %v1606 = vld [vmem:[#allocation9 + $0x2c] sm:$0xf]
        %v1607 = vld [vmem:[#allocation9 + $0x30] sm:$0xf]
        %v1608 = vld [vmem:[#allocation9 + $0x34] sm:$0xf]
        %v1609 = vld [vmem:[#allocation9 + $0x38] sm:$0xf]
        %v1610 = vld [vmem:[#allocation9 + $0x3c] sm:$0xf]
        %v1611 = vld [vmem:[#allocation9 + $0x40] sm:$0xf]
        %v1612 = vld [vmem:[#allocation9 + $0x44] sm:$0xf]
        %v1613 = vld [vmem:[#allocation9 + $0x48] sm:$0xf]
        %v1614 = vld [vmem:[#allocation9 + $0x4c] sm:$0xf]
        %v1615 = vld [vmem:[#allocation9 + $0x50] sm:$0xf]
        %v1616 = vld [vmem:[#allocation9 + $0x54] sm:$0xf]
        %v1617 = vld [vmem:[#allocation9 + $0x58] sm:$0xf]
        %v1618 = vld [vmem:[#allocation9 + $0x5c] sm:$0xf]
        %v1619 = vld [vmem:[#allocation9 + $0x60] sm:$0xf]
        %v1620 = vld [vmem:[#allocation9 + $0x64] sm:$0xf]
        %v1621 = vld [vmem:[#allocation9 + $0x68] sm:$0xf]
        %v1622 = vld [vmem:[#allocation9 + $0x6c] sm:$0xf]
        %v1623 = vld [vmem:[#allocation9 + $0x70] sm:$0xf]
        %v1624 = vld [vmem:[#allocation9 + $0x74] sm:$0xf]
        %v1625 = vld [vmem:[#allocation9 + $0x78] sm:$0xf]
        %v1626 = vld [vmem:[#allocation9 + $0x7c] sm:$0xf]
        %v1627 = vld [vmem:[#allocation9 + $0x80] sm:$0xf]
        %v1628 = vld [vmem:[#allocation9 + $0x84] sm:$0xf]
        %v1629 = vld [vmem:[#allocation9 + $0x88] sm:$0xf]
        %v1630 = vld [vmem:[#allocation9 + $0x8c] sm:$0xf]
        %v1631 = vld [vmem:[#allocation9 + $0x90] sm:$0xf]
        %v1632 = vld [vmem:[#allocation9 + $0x94] sm:$0xf]
        %v1633 = vld [vmem:[#allocation9 + $0x98] sm:$0xf]
        %v1634 = vld [vmem:[#allocation9 + $0x9c] sm:$0xf]
        %v1635 = vld [vmem:[#allocation9 + $0xa0] sm:$0xf]
        %v1636 = vld [vmem:[#allocation9 + $0xa4] sm:$0xf]
        %v1637 = vld [vmem:[#allocation9 + $0xa8] sm:$0xf]
        %v1638 = vld [vmem:[#allocation9 + $0xac] sm:$0xf]
        %v1639 = vld [vmem:[#allocation9 + $0xb0] sm:$0xf]
        %v1640 = vld [vmem:[#allocation9 + $0xb4] sm:$0xf]
        %v1641 = vld [vmem:[#allocation9 + $0xb8] sm:$0xf]
        %v1642 = vld [vmem:[#allocation9 + $0xbc] sm:$0xf]
        %s1643 = scalar_lea.vmem [#allocation9], 192
        %v1644 = vld [vmem:[%s1643] sm:$0xf]
        %v1645 = vld [vmem:[%s1643 + $0x4] sm:$0xf]
        %v1646 = vld [vmem:[%s1643 + $0x8] sm:$0xf]
        %v1647 = vld [vmem:[%s1643 + $0xc] sm:$0xf]
        %v1648 = vld [vmem:[%s1643 + $0x10] sm:$0xf]
        %v1649 = vld [vmem:[%s1643 + $0x14] sm:$0xf]
        %v1650 = vld [vmem:[%s1643 + $0x18] sm:$0xf]
        %v1651 = vld [vmem:[%s1643 + $0x1c] sm:$0xf]
        %v1652 = vld [vmem:[%s1643 + $0x20] sm:$0xf]
        %v1653 = vld [vmem:[%s1643 + $0x24] sm:$0xf]
        %v1654 = vld [vmem:[%s1643 + $0x28] sm:$0xf]
        %v1655 = vld [vmem:[%s1643 + $0x2c] sm:$0xf]
        %v1656 = vld [vmem:[%s1643 + $0x30] sm:$0xf]
        %v1657 = vld [vmem:[%s1643 + $0x34] sm:$0xf]
        %v1658 = vld [vmem:[%s1643 + $0x38] sm:$0xf]
        %v1659 = vld [vmem:[%s1643 + $0x3c] sm:$0xf]
        %v1660 = vld [vmem:[%s1643 + $0x40] sm:$0xf]
        %v1661 = vld [vmem:[%s1643 + $0x44] sm:$0xf]
        %v1662 = vld [vmem:[%s1643 + $0x48] sm:$0xf]
        %v1663 = vld [vmem:[%s1643 + $0x4c] sm:$0xf]
        %v1664 = vld [vmem:[%s1643 + $0x50] sm:$0xf]
        %v1665 = vld [vmem:[%s1643 + $0x54] sm:$0xf]
        %v1666 = vld [vmem:[%s1643 + $0x58] sm:$0xf]
        %v1667 = vld [vmem:[%s1643 + $0x5c] sm:$0xf]
        %v1668 = vld [vmem:[%s1643 + $0x60] sm:$0xf]
        %v1669 = vld [vmem:[%s1643 + $0x64] sm:$0xf]
        %v1670 = vld [vmem:[%s1643 + $0x68] sm:$0xf]
        %v1671 = vld [vmem:[%s1643 + $0x6c] sm:$0xf]
        %v1672 = vld [vmem:[%s1643 + $0x70] sm:$0xf]
        %v1673 = vld [vmem:[%s1643 + $0x74] sm:$0xf]
        %v1674 = vld [vmem:[%s1643 + $0x78] sm:$0xf]
        %v1675 = vld [vmem:[%s1643 + $0x7c] sm:$0xf]
        %v1676 = vld [vmem:[%s1643 + $0x80] sm:$0xf]
        %v1677 = vld [vmem:[%s1643 + $0x84] sm:$0xf]
        %v1678 = vld [vmem:[%s1643 + $0x88] sm:$0xf]
        %v1679 = vld [vmem:[%s1643 + $0x8c] sm:$0xf]
        %v1680 = vld [vmem:[%s1643 + $0x90] sm:$0xf]
        %v1681 = vld [vmem:[%s1643 + $0x94] sm:$0xf]
        %v1682 = vld [vmem:[%s1643 + $0x98] sm:$0xf]
        %v1683 = vld [vmem:[%s1643 + $0x9c] sm:$0xf]
        %v1684 = vld [vmem:[%s1643 + $0xa0] sm:$0xf]
        %v1685 = vld [vmem:[%s1643 + $0xa4] sm:$0xf]
        %v1686 = vld [vmem:[%s1643 + $0xa8] sm:$0xf]
        %v1687 = vld [vmem:[%s1643 + $0xac] sm:$0xf]
        %v1688 = vld [vmem:[%s1643 + $0xb0] sm:$0xf]
        %v1689 = vld [vmem:[%s1643 + $0xb4] sm:$0xf]
        %v1690 = vld [vmem:[%s1643 + $0xb8] sm:$0xf]
        %v1691 = vld [vmem:[%s1643 + $0xbc] sm:$0xf]
        %v1740 = vunpack.c.l.b16 %v1644
        %v1741 = vunpack.c.l.b16 %v1645
        %v1742 = vunpack.c.l.b16 %v1646
        %v1743 = vunpack.c.l.b16 %v1647
        %v1744 = vunpack.c.l.b16 %v1648
        %v1745 = vunpack.c.l.b16 %v1649
        %v1746 = vunpack.c.l.b16 %v1650
        %v1747 = vunpack.c.l.b16 %v1651
        %v1748 = vunpack.c.l.b16 %v1652
        %v1749 = vunpack.c.l.b16 %v1653
        %v1750 = vunpack.c.l.b16 %v1654
        %v1751 = vunpack.c.l.b16 %v1655
        %v1752 = vunpack.c.l.b16 %v1656
        %v1753 = vunpack.c.l.b16 %v1657
        %v1754 = vunpack.c.l.b16 %v1658
        %v1755 = vunpack.c.l.b16 %v1659
        %v1756 = vunpack.c.l.b16 %v1660
        %v1757 = vunpack.c.l.b16 %v1661
        %v1758 = vunpack.c.l.b16 %v1662
        %v1759 = vunpack.c.l.b16 %v1663
        %v1760 = vunpack.c.l.b16 %v1664
        %v1761 = vunpack.c.l.b16 %v1665
        %v1762 = vunpack.c.l.b16 %v1666
        %v1763 = vunpack.c.l.b16 %v1667
        %v1764 = vunpack.c.l.b16 %v1668
        %v1765 = vunpack.c.l.b16 %v1669
        %v1766 = vunpack.c.l.b16 %v1670
        %v1767 = vunpack.c.l.b16 %v1671
        %v1768 = vunpack.c.l.b16 %v1672
        %v1769 = vunpack.c.l.b16 %v1673
        %v1770 = vunpack.c.l.b16 %v1674
        %v1771 = vunpack.c.l.b16 %v1675
        %v1772 = vunpack.c.l.b16 %v1676
        %v1773 = vunpack.c.l.b16 %v1677
        %v1774 = vunpack.c.l.b16 %v1678
        %v1775 = vunpack.c.l.b16 %v1679
        %v1776 = vunpack.c.l.b16 %v1680
        %v1777 = vunpack.c.l.b16 %v1681
        %v1778 = vunpack.c.l.b16 %v1682
        %v1779 = vunpack.c.l.b16 %v1683
        %v1780 = vunpack.c.l.b16 %v1684
        %v1781 = vunpack.c.l.b16 %v1685
        %v1782 = vunpack.c.l.b16 %v1686
        %v1783 = vunpack.c.l.b16 %v1687
        %v1784 = vunpack.c.l.b16 %v1688
        %v1785 = vunpack.c.l.b16 %v1689
        %v1786 = vunpack.c.l.b16 %v1690
        %v1787 = vunpack.c.l.b16 %v1691
        %v1788 = vpack.c.b16 %v1741, %v1740
        %v1789 = vpack.c.b16 %v1743, %v1742
        %v1790 = vpack.c.b16 %v1745, %v1744
        %v1791 = vpack.c.b16 %v1747, %v1746
        %v1792 = vpack.c.b16 %v1749, %v1748
        %v1793 = vpack.c.b16 %v1751, %v1750
        %v1794 = vpack.c.b16 %v1753, %v1752
        %v1795 = vpack.c.b16 %v1755, %v1754
        %v1796 = vpack.c.b16 %v1757, %v1756
        %v1797 = vpack.c.b16 %v1759, %v1758
        %v1798 = vpack.c.b16 %v1761, %v1760
        %v1799 = vpack.c.b16 %v1763, %v1762
        %v1800 = vpack.c.b16 %v1765, %v1764
        %v1801 = vpack.c.b16 %v1767, %v1766
        %v1802 = vpack.c.b16 %v1769, %v1768
        %v1803 = vpack.c.b16 %v1771, %v1770
        %v1804 = vpack.c.b16 %v1773, %v1772
        %v1805 = vpack.c.b16 %v1775, %v1774
        %v1806 = vpack.c.b16 %v1777, %v1776
        %v1807 = vpack.c.b16 %v1779, %v1778
        %v1808 = vpack.c.b16 %v1781, %v1780
        %v1809 = vpack.c.b16 %v1783, %v1782
        %v1810 = vpack.c.b16 %v1785, %v1784
        %v1811 = vpack.c.b16 %v1787, %v1786
        %1836 = vmatprep.subr.bf16.mxu0 0
        %1837 = vmatpush1.bf16.msra.mxu0 %v1788
        %1838 = vmatprep.subr.bf16.mxu0 0
        %1839 = vmatpush1.bf16.msra.mxu0 %v1789
        %1840 = vmatprep.subr.bf16.mxu0 0
        %1841 = vmatpush1.bf16.msra.mxu0 %v1790
        %1842 = vmatprep.subr.bf16.mxu0 0
        %1843 = vmatpush1.bf16.msra.mxu0 %v1791
        %1844 = vmatprep.subr.bf16.mxu0 0
        %1845 = vmatpush1.bf16.msra.mxu0 %v1792
        %1846 = vmatprep.subr.bf16.mxu0 0
        %1847 = vmatpush1.bf16.msra.mxu0 %v1793
        %1848 = vmatprep.subr.bf16.mxu0 0
        %1849 = vmatpush1.bf16.msra.mxu0 %v1794
        %1850 = vmatprep.subr.bf16.mxu0 0
        %1851 = vmatpush1.bf16.msra.mxu0 %v1795
        %1852 = vmatprep.subr.bf16.mxu0 0
        %1853 = vmatpush1.bf16.msra.mxu0 %v1796
        %1854 = vmatprep.subr.bf16.mxu0 0
        %1855 = vmatpush1.bf16.msra.mxu0 %v1797
        %1856 = vmatprep.subr.bf16.mxu0 0
        %1857 = vmatpush1.bf16.msra.mxu0 %v1798
        %1858 = vmatprep.subr.bf16.mxu0 0
        %1859 = vmatpush1.bf16.msra.mxu0 %v1799
        %1860 = vmatprep.subr.bf16.mxu0 0
        %1861 = vmatpush1.bf16.msra.mxu0 %v1800
        %1862 = vmatprep.subr.bf16.mxu0 0
        %1863 = vmatpush1.bf16.msra.mxu0 %v1801
        %1864 = vmatprep.subr.bf16.mxu0 0
        %1865 = vmatpush1.bf16.msra.mxu0 %v1802
        %1866 = vmatprep.subr.bf16.mxu0 0
        %1867 = vmatpush1.bf16.msra.mxu0 %v1803
        %1868 = vmatprep.mubr.bf16.mxu0 %v1560
        %1869 = vmatmul.mubr.bf16.gmra.mrb[0].mxu0 %v1530
        %v1870 = vpop.f32.mrb[0].mxu0
        %v1871 = vadd.f32 0.0, %v1870
        %v1872 = vpop.f32.mrb[0].mxu0
        %v1873 = vpop.f32.mrb[0].mxu0
        %v1874 = vadd.f32 0.0, %v1873
        %v1875 = vpop.f32.mrb[0].mxu0
        %1876 = vmatprep.mubr.bf16.mxu0 %v1561
        %1877 = vmatmul.mubr.bf16.gmra.mrb[0].mxu0 %v1531
        %v1878 = vpop.f32.mrb[0].mxu0
        %v1879 = vadd.f32 0.0, %v1878
        %v1880 = vpop.f32.mrb[0].mxu0
        %v1881 = vpop.f32.mrb[0].mxu0
        %v1882 = vadd.f32 0.0, %v1881
        %v1883 = vpop.f32.mrb[0].mxu0
        %1884 = vmatprep.mubr.bf16.mxu0 %v1562
        %1885 = vmatmul.mubr.bf16.gmra.mrb[0].mxu0 %v1532
        %v1886 = vpop.f32.mrb[0].mxu0
        %v1887 = vadd.f32 0.0, %v1886
        %v1888 = vpop.f32.mrb[0].mxu0
        %v1889 = vpop.f32.mrb[0].mxu0
        %v1890 = vadd.f32 0.0, %v1889
        %v1891 = vpop.f32.mrb[0].mxu0
        %1892 = vmatprep.mubr.bf16.mxu0 %v1563
        %1893 = vmatmul.mubr.bf16.gmra.mrb[0].mxu0 %v1533
        %v1894 = vpop.f32.mrb[0].mxu0
        %v1895 = vadd.f32 0.0, %v1894
        %v1896 = vpop.f32.mrb[0].mxu0
        %v1897 = vpop.f32.mrb[0].mxu0
        %v1898 = vadd.f32 0.0, %v1897
        %v1899 = vpop.f32.mrb[0].mxu0
        %1900 = vdwg.mxu0
        %1901 = vmatprep.subr.bf16.mxu0 0
        %1902 = vmatpush1.bf16.msra.mxu0 %v1804
        %1903 = vmatprep.subr.bf16.mxu0 0
        %1904 = vmatpush1.bf16.msra.mxu0 %v1805
        %1905 = vmatprep.subr.bf16.mxu0 0
        %1906 = vmatpush1.bf16.msra.mxu0 %v1806
        %1907 = vmatprep.subr.bf16.mxu0 0
        %1908 = vmatpush1.bf16.msra.mxu0 %v1807
        %1909 = vmatprep.subr.bf16.mxu0 0
        %1910 = vmatpush1.bf16.msra.mxu0 %v1808
        %1911 = vmatprep.subr.bf16.mxu0 0
        %1912 = vmatpush1.bf16.msra.mxu0 %v1809
        %1913 = vmatprep.subr.bf16.mxu0 0
        %1914 = vmatpush1.bf16.msra.mxu0 %v1810
        %1915 = vmatprep.subr.bf16.mxu0 0
        %1916 = vmatpush1.bf16.msra.mxu0 %v1811
        %1917 = vmatprep.subr.bf16.mxu0 0
        %1918 = vmatpush1.bf16.msra.mxu0 0
        %1919 = vmatprep.subr.bf16.mxu0 0
        %1920 = vmatpush1.bf16.msra.mxu0 0
        %1921 = vmatprep.subr.bf16.mxu0 0
        %1922 = vmatpush1.bf16.msra.mxu0 0
        %1923 = vmatprep.subr.bf16.mxu0 0
        %1924 = vmatpush1.bf16.msra.mxu0 0
        %1925 = vmatprep.subr.bf16.mxu0 0
        %1926 = vmatpush1.bf16.msra.mxu0 0
        %1927 = vmatprep.subr.bf16.mxu0 0
        %1928 = vmatpush1.bf16.msra.mxu0 0
        %1929 = vmatprep.subr.bf16.mxu0 0
        %1930 = vmatpush1.bf16.msra.mxu0 0
        %1931 = vmatprep.subr.bf16.mxu0 0
        %1932 = vmatpush1.bf16.msra.mxu0 0
        %1933 = vmatprep.mubr.bf16.mxu0 0
        %1934 = vmatmul.mubr.bf16.gmra.mrb[0].mxu0 %v1590
        %v1935 = vpop.f32.mrb[0].mxu0
        %v1936 = vadd.f32 %v1871, %v1935
        %v1937 = vpop.f32.mrb[0].mxu0
        %v1938 = vpop.f32.mrb[0].mxu0
        %v1939 = vadd.f32 %v1874, %v1938
        %v1940 = vpop.f32.mrb[0].mxu0
        %1941 = vmatprep.mubr.bf16.mxu0 0
        %1942 = vmatmul.mubr.bf16.gmra.mrb[0].mxu0 %v1591
        %v1943 = vpop.f32.mrb[0].mxu0
        %v1944 = vadd.f32 %v1879, %v1943
        %v1945 = vpop.f32.mrb[0].mxu0
        %v1946 = vpop.f32.mrb[0].mxu0
        %v1947 = vadd.f32 %v1882, %v1946
        %v1948 = vpop.f32.mrb[0].mxu0
        %1949 = vmatprep.mubr.bf16.mxu0 0
        %1950 = vmatmul.mubr.bf16.gmra.mrb[0].mxu0 %v1592
        %v1951 = vpop.f32.mrb[0].mxu0
        %v1952 = vadd.f32 %v1887, %v1951
        %v1953 = vpop.f32.mrb[0].mxu0
        %v1954 = vpop.f32.mrb[0].mxu0
        %v1955 = vadd.f32 %v1890, %v1954
        %v1956 = vpop.f32.mrb[0].mxu0
        %1957 = vmatprep.mubr.bf16.mxu0 0
        %1958 = vmatmul.mubr.bf16.gmra.mrb[0].mxu0 %v1593
        %v1959 = vpop.f32.mrb[0].mxu0
        %v1960 = vadd.f32 %v1895, %v1959
        %v1961 = vpop.f32.mrb[0].mxu0
        %v1962 = vpop.f32.mrb[0].mxu0
        %v1963 = vadd.f32 %v1898, %v1962
        %v1964 = vpop.f32.mrb[0].mxu0
        %1965 = vdwg.mxu0
        %v2014 = vunpack.c.l.b16 %v1595
        %v2015 = vunpack.c.l.b16 %v1596
        %v2016 = vunpack.c.l.b16 %v1597
        %v2017 = vunpack.c.l.b16 %v1598
        %v2018 = vunpack.c.l.b16 %v1599
        %v2019 = vunpack.c.l.b16 %v1600
        %v2020 = vunpack.c.l.b16 %v1601
        %v2021 = vunpack.c.l.b16 %v1602
        %v2022 = vunpack.c.l.b16 %v1603
        %v2023 = vunpack.c.l.b16 %v1604
        %v2024 = vunpack.c.l.b16 %v1605
        %v2025 = vunpack.c.l.b16 %v1606
        %v2026 = vunpack.c.l.b16 %v1607
        %v2027 = vunpack.c.l.b16 %v1608
        %v2028 = vunpack.c.l.b16 %v1609
        %v2029 = vunpack.c.l.b16 %v1610
        %v2030 = vunpack.c.l.b16 %v1611
        %v2031 = vunpack.c.l.b16 %v1612
        %v2032 = vunpack.c.l.b16 %v1613
        %v2033 = vunpack.c.l.b16 %v1614
        %v2034 = vunpack.c.l.b16 %v1615
        %v2035 = vunpack.c.l.b16 %v1616
        %v2036 = vunpack.c.l.b16 %v1617
        %v2037 = vunpack.c.l.b16 %v1618
        %v2038 = vunpack.c.l.b16 %v1619
        %v2039 = vunpack.c.l.b16 %v1620
        %v2040 = vunpack.c.l.b16 %v1621
        %v2041 = vunpack.c.l.b16 %v1622
        %v2042 = vunpack.c.l.b16 %v1623
        %v2043 = vunpack.c.l.b16 %v1624
        %v2044 = vunpack.c.l.b16 %v1625
        %v2045 = vunpack.c.l.b16 %v1626
        %v2046 = vunpack.c.l.b16 %v1627
        %v2047 = vunpack.c.l.b16 %v1628
        %v2048 = vunpack.c.l.b16 %v1629
        %v2049 = vunpack.c.l.b16 %v1630
        %v2050 = vunpack.c.l.b16 %v1631
        %v2051 = vunpack.c.l.b16 %v1632
        %v2052 = vunpack.c.l.b16 %v1633
        %v2053 = vunpack.c.l.b16 %v1634
        %v2054 = vunpack.c.l.b16 %v1635
        %v2055 = vunpack.c.l.b16 %v1636
        %v2056 = vunpack.c.l.b16 %v1637
        %v2057 = vunpack.c.l.b16 %v1638
        %v2058 = vunpack.c.l.b16 %v1639
        %v2059 = vunpack.c.l.b16 %v1640
        %v2060 = vunpack.c.l.b16 %v1641
        %v2061 = vunpack.c.l.b16 %v1642
        %v2062 = vpack.c.b16 %v2015, %v2014
        %v2063 = vpack.c.b16 %v2017, %v2016
        %v2064 = vpack.c.b16 %v2019, %v2018
        %v2065 = vpack.c.b16 %v2021, %v2020
        %v2066 = vpack.c.b16 %v2023, %v2022
        %v2067 = vpack.c.b16 %v2025, %v2024
        %v2068 = vpack.c.b16 %v2027, %v2026
        %v2069 = vpack.c.b16 %v2029, %v2028
        %v2070 = vpack.c.b16 %v2031, %v2030
        %v2071 = vpack.c.b16 %v2033, %v2032
        %v2072 = vpack.c.b16 %v2035, %v2034
        %v2073 = vpack.c.b16 %v2037, %v2036
        %v2074 = vpack.c.b16 %v2039, %v2038
        %v2075 = vpack.c.b16 %v2041, %v2040
        %v2076 = vpack.c.b16 %v2043, %v2042
        %v2077 = vpack.c.b16 %v2045, %v2044
        %v2078 = vpack.c.b16 %v2047, %v2046
        %v2079 = vpack.c.b16 %v2049, %v2048
        %v2080 = vpack.c.b16 %v2051, %v2050
        %v2081 = vpack.c.b16 %v2053, %v2052
        %v2082 = vpack.c.b16 %v2055, %v2054
        %v2083 = vpack.c.b16 %v2057, %v2056
        %v2084 = vpack.c.b16 %v2059, %v2058
        %v2085 = vpack.c.b16 %v2061, %v2060
        %2110 = vmatprep.subr.bf16.mxu0 0
        %2111 = vmatpush1.bf16.msra.mxu0 %v2062
        %2112 = vmatprep.subr.bf16.mxu0 0
        %2113 = vmatpush1.bf16.msra.mxu0 %v2063
        %2114 = vmatprep.subr.bf16.mxu0 0
        %2115 = vmatpush1.bf16.msra.mxu0 %v2064
        %2116 = vmatprep.subr.bf16.mxu0 0
        %2117 = vmatpush1.bf16.msra.mxu0 %v2065
        %2118 = vmatprep.subr.bf16.mxu0 0
        %2119 = vmatpush1.bf16.msra.mxu0 %v2066
        %2120 = vmatprep.subr.bf16.mxu0 0
        %2121 = vmatpush1.bf16.msra.mxu0 %v2067
        %2122 = vmatprep.subr.bf16.mxu0 0
        %2123 = vmatpush1.bf16.msra.mxu0 %v2068
        %2124 = vmatprep.subr.bf16.mxu0 0
        %2125 = vmatpush1.bf16.msra.mxu0 %v2069
        %2126 = vmatprep.subr.bf16.mxu0 0
        %2127 = vmatpush1.bf16.msra.mxu0 %v2070
        %2128 = vmatprep.subr.bf16.mxu0 0
        %2129 = vmatpush1.bf16.msra.mxu0 %v2071
        %2130 = vmatprep.subr.bf16.mxu0 0
        %2131 = vmatpush1.bf16.msra.mxu0 %v2072
        %2132 = vmatprep.subr.bf16.mxu0 0
        %2133 = vmatpush1.bf16.msra.mxu0 %v2073
        %2134 = vmatprep.subr.bf16.mxu0 0
        %2135 = vmatpush1.bf16.msra.mxu0 %v2074
        %2136 = vmatprep.subr.bf16.mxu0 0
        %2137 = vmatpush1.bf16.msra.mxu0 %v2075
        %2138 = vmatprep.subr.bf16.mxu0 0
        %2139 = vmatpush1.bf16.msra.mxu0 %v2076
        %2140 = vmatprep.subr.bf16.mxu0 0
        %2141 = vmatpush1.bf16.msra.mxu0 %v2077
        %2142 = vmatprep.mubr.bf16.mxu0 %v1559
        %2143 = vmatmul.mubr.bf16.gmra.mrb[0].mxu0 %v1529
        %v2144 = vpop.f32.mrb[0].mxu0
        %v2145 = vadd.f32 %v1936, %v2144
        %v2146 = vpop.f32.mrb[0].mxu0
        %v2147 = vpop.f32.mrb[0].mxu0
        %v2148 = vadd.f32 %v1939, %v2147
        %v2149 = vpop.f32.mrb[0].mxu0
        %2150 = vmatprep.mubr.bf16.mxu0 %v1560
        %2151 = vmatmul.mubr.bf16.gmra.mrb[0].mxu0 %v1530
        %v2152 = vpop.f32.mrb[0].mxu0
        %v2153 = vadd.f32 %v1944, %v2152
        %v2154 = vpop.f32.mrb[0].mxu0
        %v2155 = vpop.f32.mrb[0].mxu0
        %v2156 = vadd.f32 %v1947, %v2155
        %v2157 = vpop.f32.mrb[0].mxu0
        %2158 = vmatprep.mubr.bf16.mxu0 %v1561
        %2159 = vmatmul.mubr.bf16.gmra.mrb[0].mxu0 %v1531
        %v2160 = vpop.f32.mrb[0].mxu0
        %v2161 = vadd.f32 %v1952, %v2160
        %v2162 = vpop.f32.mrb[0].mxu0
        %v2163 = vpop.f32.mrb[0].mxu0
        %v2164 = vadd.f32 %v1955, %v2163
        %v2165 = vpop.f32.mrb[0].mxu0
        %2166 = vmatprep.mubr.bf16.mxu0 %v1562
        %2167 = vmatmul.mubr.bf16.gmra.mrb[0].mxu0 %v1532
        %v2168 = vpop.f32.mrb[0].mxu0
        %v2169 = vadd.f32 %v1960, %v2168
        %v2170 = vpop.f32.mrb[0].mxu0
        %v2171 = vpop.f32.mrb[0].mxu0
        %v2172 = vadd.f32 %v1963, %v2171
        %v2173 = vpop.f32.mrb[0].mxu0
        %2174 = vdwg.mxu0
        %2175 = vmatprep.subr.bf16.mxu0 0
        %2176 = vmatpush1.bf16.msra.mxu0 %v2078
        %2177 = vmatprep.subr.bf16.mxu0 0
        %2178 = vmatpush1.bf16.msra.mxu0 %v2079
        %2179 = vmatprep.subr.bf16.mxu0 0
        %2180 = vmatpush1.bf16.msra.mxu0 %v2080
        %2181 = vmatprep.subr.bf16.mxu0 0
        %2182 = vmatpush1.bf16.msra.mxu0 %v2081
        %2183 = vmatprep.subr.bf16.mxu0 0
        %2184 = vmatpush1.bf16.msra.mxu0 %v2082
        %2185 = vmatprep.subr.bf16.mxu0 0
        %2186 = vmatpush1.bf16.msra.mxu0 %v2083
        %2187 = vmatprep.subr.bf16.mxu0 0
        %2188 = vmatpush1.bf16.msra.mxu0 %v2084
        %2189 = vmatprep.subr.bf16.mxu0 0
        %2190 = vmatpush1.bf16.msra.mxu0 %v2085
        %2191 = vmatprep.subr.bf16.mxu0 0
        %2192 = vmatpush1.bf16.msra.mxu0 0
        %2193 = vmatprep.subr.bf16.mxu0 0
        %2194 = vmatpush1.bf16.msra.mxu0 0
        %2195 = vmatprep.subr.bf16.mxu0 0
        %2196 = vmatpush1.bf16.msra.mxu0 0
        %2197 = vmatprep.subr.bf16.mxu0 0
        %2198 = vmatpush1.bf16.msra.mxu0 0
        %2199 = vmatprep.subr.bf16.mxu0 0
        %2200 = vmatpush1.bf16.msra.mxu0 0
        %2201 = vmatprep.subr.bf16.mxu0 0
        %2202 = vmatpush1.bf16.msra.mxu0 0
        %2203 = vmatprep.subr.bf16.mxu0 0
        %2204 = vmatpush1.bf16.msra.mxu0 0
        %2205 = vmatprep.subr.bf16.mxu0 0
        %2206 = vmatpush1.bf16.msra.mxu0 0
        %2207 = vmatprep.mubr.bf16.mxu0 0
        %2208 = vmatmul.mubr.bf16.gmra.mrb[0].mxu0 %v1589
        %v2209 = vpop.f32.mrb[0].mxu0
        %v2210 = vadd.f32 %v2145, %v2209
        %v2211 = vpop.f32.mrb[0].mxu0
        %v2212 = vpop.f32.mrb[0].mxu0
        %v2213 = vadd.f32 %v2148, %v2212
        %v2214 = vpop.f32.mrb[0].mxu0
        %2215 = vmatprep.mubr.bf16.mxu0 0
        %2216 = vmatmul.mubr.bf16.gmra.mrb[0].mxu0 %v1590
        %v2217 = vpop.f32.mrb[0].mxu0
        %v2218 = vadd.f32 %v2153, %v2217
        %v2219 = vpop.f32.mrb[0].mxu0
        %v2220 = vpop.f32.mrb[0].mxu0
        %v2221 = vadd.f32 %v2156, %v2220
        %v2222 = vpop.f32.mrb[0].mxu0
        %2223 = vmatprep.mubr.bf16.mxu0 0
        %2224 = vmatmul.mubr.bf16.gmra.mrb[0].mxu0 %v1591
        %v2225 = vpop.f32.mrb[0].mxu0
        %v2226 = vadd.f32 %v2161, %v2225
        %v2227 = vpop.f32.mrb[0].mxu0
        %v2228 = vpop.f32.mrb[0].mxu0
        %v2229 = vadd.f32 %v2164, %v2228
        %v2230 = vpop.f32.mrb[0].mxu0
        %2231 = vmatprep.mubr.bf16.mxu0 0
        %2232 = vmatmul.mubr.bf16.gmra.mrb[0].mxu0 %v1592
        %v2233 = vpop.f32.mrb[0].mxu0
        %v2234 = vadd.f32 %v2169, %v2233
        %v2235 = vpop.f32.mrb[0].mxu0
        %v2236 = vpop.f32.mrb[0].mxu0
        %v2237 = vadd.f32 %v2172, %v2236
        %v2238 = vpop.f32.mrb[0].mxu0
        %2239 = vdwg.mxu0
        %s2240 = scalar_lea.vmem [#allocation9], 384
        %v2241 = vld [vmem:[%s2240] sm:$0xf]
        %v2242 = vld [vmem:[%s2240 + $0x4] sm:$0xf]
        %v2243 = vld [vmem:[%s2240 + $0x8] sm:$0xf]
        %v2244 = vld [vmem:[%s2240 + $0xc] sm:$0xf]
        %v2245 = vld [vmem:[%s2240 + $0x10] sm:$0xf]
        %v2246 = vld [vmem:[%s2240 + $0x14] sm:$0xf]
        %v2247 = vld [vmem:[%s2240 + $0x18] sm:$0xf]
        %v2248 = vld [vmem:[%s2240 + $0x1c] sm:$0xf]
        %v2249 = vld [vmem:[%s2240 + $0x20] sm:$0xf]
        %v2250 = vld [vmem:[%s2240 + $0x24] sm:$0xf]
        %v2251 = vld [vmem:[%s2240 + $0x28] sm:$0xf]
        %v2252 = vld [vmem:[%s2240 + $0x2c] sm:$0xf]
        %v2253 = vld [vmem:[%s2240 + $0x30] sm:$0xf]
        %v2254 = vld [vmem:[%s2240 + $0x34] sm:$0xf]
        %v2255 = vld [vmem:[%s2240 + $0x38] sm:$0xf]
        %v2256 = vld [vmem:[%s2240 + $0x3c] sm:$0xf]
        %v2257 = vld [vmem:[%s2240 + $0x40] sm:$0xf]
        %v2258 = vld [vmem:[%s2240 + $0x44] sm:$0xf]
        %v2259 = vld [vmem:[%s2240 + $0x48] sm:$0xf]
        %v2260 = vld [vmem:[%s2240 + $0x4c] sm:$0xf]
        %v2261 = vld [vmem:[%s2240 + $0x50] sm:$0xf]
        %v2262 = vld [vmem:[%s2240 + $0x54] sm:$0xf]
        %v2263 = vld [vmem:[%s2240 + $0x58] sm:$0xf]
        %v2264 = vld [vmem:[%s2240 + $0x5c] sm:$0xf]
        %v2265 = vld [vmem:[%s2240 + $0x60] sm:$0xf]
        %v2266 = vld [vmem:[%s2240 + $0x64] sm:$0xf]
        %v2267 = vld [vmem:[%s2240 + $0x68] sm:$0xf]
        %v2268 = vld [vmem:[%s2240 + $0x6c] sm:$0xf]
        %v2269 = vld [vmem:[%s2240 + $0x70] sm:$0xf]
        %v2270 = vld [vmem:[%s2240 + $0x74] sm:$0xf]
        %v2271 = vld [vmem:[%s2240 + $0x78] sm:$0xf]
        %v2272 = vld [vmem:[%s2240 + $0x7c] sm:$0xf]
        %v2273 = vld [vmem:[%s2240 + $0x80] sm:$0xf]
        %v2274 = vld [vmem:[%s2240 + $0x84] sm:$0xf]
        %v2275 = vld [vmem:[%s2240 + $0x88] sm:$0xf]
        %v2276 = vld [vmem:[%s2240 + $0x8c] sm:$0xf]
        %v2277 = vld [vmem:[%s2240 + $0x90] sm:$0xf]
        %v2278 = vld [vmem:[%s2240 + $0x94] sm:$0xf]
        %v2279 = vld [vmem:[%s2240 + $0x98] sm:$0xf]
        %v2280 = vld [vmem:[%s2240 + $0x9c] sm:$0xf]
        %v2281 = vld [vmem:[%s2240 + $0xa0] sm:$0xf]
        %v2282 = vld [vmem:[%s2240 + $0xa4] sm:$0xf]
        %v2283 = vld [vmem:[%s2240 + $0xa8] sm:$0xf]
        %v2284 = vld [vmem:[%s2240 + $0xac] sm:$0xf]
        %v2285 = vld [vmem:[%s2240 + $0xb0] sm:$0xf]
        %v2286 = vld [vmem:[%s2240 + $0xb4] sm:$0xf]
        %v2287 = vld [vmem:[%s2240 + $0xb8] sm:$0xf]
        %v2288 = vld [vmem:[%s2240 + $0xbc] sm:$0xf]
        %v2337 = vunpack.c.l.b16 %v2241
        %v2338 = vunpack.c.l.b16 %v2242
        %v2339 = vunpack.c.l.b16 %v2243
        %v2340 = vunpack.c.l.b16 %v2244
        %v2341 = vunpack.c.l.b16 %v2245
        %v2342 = vunpack.c.l.b16 %v2246
        %v2343 = vunpack.c.l.b16 %v2247
        %v2344 = vunpack.c.l.b16 %v2248
        %v2345 = vunpack.c.l.b16 %v2249
        %v2346 = vunpack.c.l.b16 %v2250
        %v2347 = vunpack.c.l.b16 %v2251
        %v2348 = vunpack.c.l.b16 %v2252
        %v2349 = vunpack.c.l.b16 %v2253
        %v2350 = vunpack.c.l.b16 %v2254
        %v2351 = vunpack.c.l.b16 %v2255
        %v2352 = vunpack.c.l.b16 %v2256
        %v2353 = vunpack.c.l.b16 %v2257
        %v2354 = vunpack.c.l.b16 %v2258
        %v2355 = vunpack.c.l.b16 %v2259
        %v2356 = vunpack.c.l.b16 %v2260
        %v2357 = vunpack.c.l.b16 %v2261
        %v2358 = vunpack.c.l.b16 %v2262
        %v2359 = vunpack.c.l.b16 %v2263
        %v2360 = vunpack.c.l.b16 %v2264
        %v2361 = vunpack.c.l.b16 %v2265
        %v2362 = vunpack.c.l.b16 %v2266
        %v2363 = vunpack.c.l.b16 %v2267
        %v2364 = vunpack.c.l.b16 %v2268
        %v2365 = vunpack.c.l.b16 %v2269
        %v2366 = vunpack.c.l.b16 %v2270
        %v2367 = vunpack.c.l.b16 %v2271
        %v2368 = vunpack.c.l.b16 %v2272
        %v2369 = vunpack.c.l.b16 %v2273
        %v2370 = vunpack.c.l.b16 %v2274
        %v2371 = vunpack.c.l.b16 %v2275
        %v2372 = vunpack.c.l.b16 %v2276
        %v2373 = vunpack.c.l.b16 %v2277
        %v2374 = vunpack.c.l.b16 %v2278
        %v2375 = vunpack.c.l.b16 %v2279
        %v2376 = vunpack.c.l.b16 %v2280
        %v2377 = vunpack.c.l.b16 %v2281
        %v2378 = vunpack.c.l.b16 %v2282
        %v2379 = vunpack.c.l.b16 %v2283
        %v2380 = vunpack.c.l.b16 %v2284
        %v2381 = vunpack.c.l.b16 %v2285
        %v2382 = vunpack.c.l.b16 %v2286
        %v2383 = vunpack.c.l.b16 %v2287
        %v2384 = vunpack.c.l.b16 %v2288
        %v2385 = vpack.c.b16 %v2338, %v2337
        %v2386 = vpack.c.b16 %v2340, %v2339
        %v2387 = vpack.c.b16 %v2342, %v2341
        %v2388 = vpack.c.b16 %v2344, %v2343
        %v2389 = vpack.c.b16 %v2346, %v2345
        %v2390 = vpack.c.b16 %v2348, %v2347
        %v2391 = vpack.c.b16 %v2350, %v2349
        %v2392 = vpack.c.b16 %v2352, %v2351
        %v2393 = vpack.c.b16 %v2354, %v2353
        %v2394 = vpack.c.b16 %v2356, %v2355
        %v2395 = vpack.c.b16 %v2358, %v2357
        %v2396 = vpack.c.b16 %v2360, %v2359
        %v2397 = vpack.c.b16 %v2362, %v2361
        %v2398 = vpack.c.b16 %v2364, %v2363
        %v2399 = vpack.c.b16 %v2366, %v2365
        %v2400 = vpack.c.b16 %v2368, %v2367
        %v2401 = vpack.c.b16 %v2370, %v2369
        %v2402 = vpack.c.b16 %v2372, %v2371
        %v2403 = vpack.c.b16 %v2374, %v2373
        %v2404 = vpack.c.b16 %v2376, %v2375
        %v2405 = vpack.c.b16 %v2378, %v2377
        %v2406 = vpack.c.b16 %v2380, %v2379
        %v2407 = vpack.c.b16 %v2382, %v2381
        %v2408 = vpack.c.b16 %v2384, %v2383
        %2433 = vmatprep.subr.bf16.mxu0 0
        %2434 = vmatpush1.bf16.msra.mxu0 %v2385
        %2435 = vmatprep.subr.bf16.mxu0 0
        %2436 = vmatpush1.bf16.msra.mxu0 %v2386
        %2437 = vmatprep.subr.bf16.mxu0 0
        %2438 = vmatpush1.bf16.msra.mxu0 %v2387
        %2439 = vmatprep.subr.bf16.mxu0 0
        %2440 = vmatpush1.bf16.msra.mxu0 %v2388
        %2441 = vmatprep.subr.bf16.mxu0 0
        %2442 = vmatpush1.bf16.msra.mxu0 %v2389
        %2443 = vmatprep.subr.bf16.mxu0 0
        %2444 = vmatpush1.bf16.msra.mxu0 %v2390
        %2445 = vmatprep.subr.bf16.mxu0 0
        %2446 = vmatpush1.bf16.msra.mxu0 %v2391
        %2447 = vmatprep.subr.bf16.mxu0 0
        %2448 = vmatpush1.bf16.msra.mxu0 %v2392
        %2449 = vmatprep.subr.bf16.mxu0 0
        %2450 = vmatpush1.bf16.msra.mxu0 %v2393
        %2451 = vmatprep.subr.bf16.mxu0 0
        %2452 = vmatpush1.bf16.msra.mxu0 %v2394
        %2453 = vmatprep.subr.bf16.mxu0 0
        %2454 = vmatpush1.bf16.msra.mxu0 %v2395
        %2455 = vmatprep.subr.bf16.mxu0 0
        %2456 = vmatpush1.bf16.msra.mxu0 %v2396
        %2457 = vmatprep.subr.bf16.mxu0 0
        %2458 = vmatpush1.bf16.msra.mxu0 %v2397
        %2459 = vmatprep.subr.bf16.mxu0 0
        %2460 = vmatpush1.bf16.msra.mxu0 %v2398
        %2461 = vmatprep.subr.bf16.mxu0 0
        %2462 = vmatpush1.bf16.msra.mxu0 %v2399
        %2463 = vmatprep.subr.bf16.mxu0 0
        %2464 = vmatpush1.bf16.msra.mxu0 %v2400
        %2465 = vmatprep.mubr.bf16.mxu0 %v1561
        %2466 = vmatmul.mubr.bf16.gmra.mrb[0].mxu0 %v1531
        %v2467 = vpop.f32.mrb[0].mxu0
        %v2468 = vadd.f32 0.0, %v2467
        %v2469 = vpop.f32.mrb[0].mxu0
        %v2470 = vpop.f32.mrb[0].mxu0
        %v2471 = vadd.f32 0.0, %v2470
        %v2472 = vpop.f32.mrb[0].mxu0
        %2473 = vmatprep.mubr.bf16.mxu0 %v1562
        %2474 = vmatmul.mubr.bf16.gmra.mrb[0].mxu0 %v1532
        %v2475 = vpop.f32.mrb[0].mxu0
        %v2476 = vadd.f32 0.0, %v2475
        %v2477 = vpop.f32.mrb[0].mxu0
        %v2478 = vpop.f32.mrb[0].mxu0
        %v2479 = vadd.f32 0.0, %v2478
        %v2480 = vpop.f32.mrb[0].mxu0
        %2481 = vmatprep.mubr.bf16.mxu0 %v1563
        %2482 = vmatmul.mubr.bf16.gmra.mrb[0].mxu0 %v1533
        %v2483 = vpop.f32.mrb[0].mxu0
        %v2484 = vadd.f32 0.0, %v2483
        %v2485 = vpop.f32.mrb[0].mxu0
        %v2486 = vpop.f32.mrb[0].mxu0
        %v2487 = vadd.f32 0.0, %v2486
        %v2488 = vpop.f32.mrb[0].mxu0
        %2489 = vmatprep.mubr.bf16.mxu0 %v1564
        %2490 = vmatmul.mubr.bf16.gmra.mrb[0].mxu0 %v1534
        %v2491 = vpop.f32.mrb[0].mxu0
        %v2492 = vadd.f32 0.0, %v2491
        %v2493 = vpop.f32.mrb[0].mxu0
        %v2494 = vpop.f32.mrb[0].mxu0
        %v2495 = vadd.f32 0.0, %v2494
        %v2496 = vpop.f32.mrb[0].mxu0
        %2497 = vdwg.mxu0
        %2498 = vmatprep.subr.bf16.mxu0 0
        %2499 = vmatpush1.bf16.msra.mxu0 %v2401
        %2500 = vmatprep.subr.bf16.mxu0 0
        %2501 = vmatpush1.bf16.msra.mxu0 %v2402
        %2502 = vmatprep.subr.bf16.mxu0 0
        %2503 = vmatpush1.bf16.msra.mxu0 %v2403
        %2504 = vmatprep.subr.bf16.mxu0 0
        %2505 = vmatpush1.bf16.msra.mxu0 %v2404
        %2506 = vmatprep.subr.bf16.mxu0 0
        %2507 = vmatpush1.bf16.msra.mxu0 %v2405
        %2508 = vmatprep.subr.bf16.mxu0 0
        %2509 = vmatpush1.bf16.msra.mxu0 %v2406
        %2510 = vmatprep.subr.bf16.mxu0 0
        %2511 = vmatpush1.bf16.msra.mxu0 %v2407
        %2512 = vmatprep.subr.bf16.mxu0 0
        %2513 = vmatpush1.bf16.msra.mxu0 %v2408
        %2514 = vmatprep.subr.bf16.mxu0 0
        %2515 = vmatpush1.bf16.msra.mxu0 0
        %2516 = vmatprep.subr.bf16.mxu0 0
        %2517 = vmatpush1.bf16.msra.mxu0 0
        %2518 = vmatprep.subr.bf16.mxu0 0
        %2519 = vmatpush1.bf16.msra.mxu0 0
        %2520 = vmatprep.subr.bf16.mxu0 0
        %2521 = vmatpush1.bf16.msra.mxu0 0
        %2522 = vmatprep.subr.bf16.mxu0 0
        %2523 = vmatpush1.bf16.msra.mxu0 0
        %2524 = vmatprep.subr.bf16.mxu0 0
        %2525 = vmatpush1.bf16.msra.mxu0 0
        %2526 = vmatprep.subr.bf16.mxu0 0
        %2527 = vmatpush1.bf16.msra.mxu0 0
        %2528 = vmatprep.subr.bf16.mxu0 0
        %2529 = vmatpush1.bf16.msra.mxu0 0
        %2530 = vmatprep.mubr.bf16.mxu0 0
        %2531 = vmatmul.mubr.bf16.gmra.mrb[0].mxu0 %v1591
        %v2532 = vpop.f32.mrb[0].mxu0
        %v2533 = vadd.f32 %v2468, %v2532
        %v2534 = vpop.f32.mrb[0].mxu0
        %v2535 = vpop.f32.mrb[0].mxu0
        %v2536 = vadd.f32 %v2471, %v2535
        %v2537 = vpop.f32.mrb[0].mxu0
        %2538 = vmatprep.mubr.bf16.mxu0 0
        %2539 = vmatmul.mubr.bf16.gmra.mrb[0].mxu0 %v1592
        %v2540 = vpop.f32.mrb[0].mxu0
        %v2541 = vadd.f32 %v2476, %v2540
        %v2542 = vpop.f32.mrb[0].mxu0
        %v2543 = vpop.f32.mrb[0].mxu0
        %v2544 = vadd.f32 %v2479, %v2543
        %v2545 = vpop.f32.mrb[0].mxu0
        %2546 = vmatprep.mubr.bf16.mxu0 0
        %2547 = vmatmul.mubr.bf16.gmra.mrb[0].mxu0 %v1593
        %v2548 = vpop.f32.mrb[0].mxu0
        %v2549 = vadd.f32 %v2484, %v2548
        %v2550 = vpop.f32.mrb[0].mxu0
        %v2551 = vpop.f32.mrb[0].mxu0
        %v2552 = vadd.f32 %v2487, %v2551
        %v2553 = vpop.f32.mrb[0].mxu0
        %2554 = vmatprep.mubr.bf16.mxu0 0
        %2555 = vmatmul.mubr.bf16.gmra.mrb[0].mxu0 %v1594
        %v2556 = vpop.f32.mrb[0].mxu0
        %v2557 = vadd.f32 %v2492, %v2556
        %v2558 = vpop.f32.mrb[0].mxu0
        %v2559 = vpop.f32.mrb[0].mxu0
        %v2560 = vadd.f32 %v2495, %v2559
        %v2561 = vpop.f32.mrb[0].mxu0
        %2562 = vdwg.mxu0
        %v2563 = vadd.f32 %v2210, %v2533
        %v2564 = vadd.f32 %v2213, %v2536
        %v2565 = vadd.f32 %v2218, %v2541
        %v2566 = vadd.f32 %v2221, %v2544
        %v2567 = vadd.f32 %v2226, %v2549
        %v2568 = vadd.f32 %v2229, %v2552
        %v2569 = vadd.f32 %v2234, %v2557
        %v2570 = vadd.f32 %v2237, %v2560
        %v2571 = vld [vmem:[#allocation10] sm:$0x1]
        %v2573 = vlaneseq
        %v2574 = vshrl.u32 %v2573, 7
        %v2575 = vsub.s32 0, %v2574
        %v2576 = vrot.slane %v2571, %v2575
        %v2578 = vadd.f32 %v2563, %v2576
        %v2579 = vadd.f32 %v2564, %v2576
        %v2580 = vadd.f32 %v2565, %v2576
        %v2581 = vadd.f32 %v2566, %v2576
        %v2582 = vadd.f32 %v2567, %v2576
        %v2583 = vadd.f32 %v2568, %v2576
        %v2584 = vadd.f32 %v2569, %v2576
        %v2585 = vadd.f32 %v2570, %v2576
        %v2586 = vadd.f32 %v2578, %v400
        %v2587 = vadd.f32 %v2579, %v408
        %v2588 = vadd.f32 %v2580, %v401
        %v2589 = vadd.f32 %v2581, %v409
        %v2590 = vadd.f32 %v2582, %v402
        %v2591 = vadd.f32 %v2583, %v410
        %v2592 = vadd.f32 %v2584, %v403
        %v2593 = vadd.f32 %v2585, %v411
        %2594 = vst [vmem:[%s245] sm:$0xff] %v2586
        %2595 = vst [vmem:[%s245 + $0x8] sm:$0xf] %v2587
        %2596 = vst [vmem:[%s245 + $0x10] sm:$0xff] %v2588
        %2597 = vst [vmem:[%s245 + $0x18] sm:$0xf] %v2589
        %2598 = vst [vmem:[%s245 + $0x20] sm:$0xff] %v2590
        %2599 = vst [vmem:[%s245 + $0x28] sm:$0xf] %v2591
        %2600 = vst [vmem:[%s245 + $0x30] sm:$0xff] %v2592
        %2601 = vst [vmem:[%s245 + $0x38] sm:$0xf] %v2593
        %s2602 = sand.u32 %s128, 1
        %s2603 = scalar_lea.sflag [#allocation6], %s2602
        %s2604 = sand.u32 %s128, 1
        %s2605 = smul.addr %s2604, 64
        %s2606 = scalar_lea.vmem [#allocation12], %s2605
        // Predicated region
        $region69: #{tpu_custom_call.1} parent=35 // pred_check
          %p2607 = pneg %p138
        $region70: #{tpu_custom_call.1} parent=35 // pred_check_branch
          %2609 = sbr.rel (%p2607) target = $region72
        $region71: #{tpu_custom_call.1} parent=35 // pred_region
          %s2610 = smul.u32 4, %s27
          %s2612 = ssub.s32 1024, 1024
          %2613 = vsyncadd %s2603, %s2612
          %s2614 = smul.addr %s2610, 2
          %s2615 = smul.addr %s26, 24
          %s2616 = sadd.s32 %s2614, %s2615
          %s2617 = smul.addr %s2616, 128
          %s2618 = scalar_lea.hbm %s5, %s2617
          %s2619 = sshll.u32 %s2606, 4
          %s2620 = int_to_ptr.vmem [resolvable:$true] %s2619
          %2625 = dma.vmem_to_hbm [thread:$0]  %s2620, 1024, %s2618, %s2603, 128, 128, 8
        $region72: #{tpu_custom_call.1} parent=35 // pred_fallthru
          _
      $region36: #{tpu_custom_call.1} parent=5 // pred_fallthru
        _
      %p2626 = scmp.le.s32.totalorder 2, %s17
      // Predicated region
      $region73: #{tpu_custom_call.1} parent=5 // pred_check
        %p2627 = pneg %p2626
      $region74: #{tpu_custom_call.1} parent=5 // pred_check_branch
        %2629 = sbr.rel (%p2627) target = $region76
      $region75: #{tpu_custom_call.1} parent=5 // pred_region
        %s2630 = ssub.s32 %s17, 2
        // Predicated region
        $region77: #{tpu_custom_call.1} parent=75 // pred_check
          %p2631 = pneg %p144
        $region78: #{tpu_custom_call.1} parent=75 // pred_check_branch
          %2633 = sbr.rel (%p2631) target = $region80
        $region79: #{tpu_custom_call.1} parent=75 // pred_region
          %s2634 = sand.u32 %s129, 1
          %s2635 = scalar_lea.sflag [#allocation6], %s2634
          %s2636 = sand.u32 %s129, 1
          %s2637 = smul.addr %s2636, 64
          %s2638 = scalar_lea.vmem [#allocation12], %s2637
          %2639 = dma.done %s2635, 1024
        $region80: #{tpu_custom_call.1} parent=75 // pred_fallthru
          _
      $region76: #{tpu_custom_call.1} parent=5 // pred_fallthru
        _
    $region6: #{tpu_custom_call.1} parent=1 // loop_footer
      %s21 = sadd.s32 1, %s17
    $region7: #{tpu_custom_call.1} parent=1 // loop_footer_branch
      %16 = sbr.rel target = $region3
    $region8: #{tpu_custom_call.1} parent=1 // loop_exit
      _
    %2640 = vsyncpa [#allocation5], 1
    %s2641 = scalar_lea.sflag [#allocation5], 1
    %2642 = vsyncpa %s2641, 1
    %2643 = vsyncpa [#allocation8], 1
    %2644 = vsyncpa [#allocation11], 1
    %2645 = vsyncpa [#allocation6], 1
    %s2646 = scalar_lea.sflag [#allocation6], 1
    %2647 = vsyncpa %s2646, 1
  %2648 = vsyncmov [#allocation3]
  %s2649 = vpop.sfrf %2648
  %p2650 = scmp.eq.s32.totalorder %s2649, 0
  %p2651 = pneg %p2650
  %2653 = shalt.err (%p2651)
  %s2654 = scalar_lea.sflag [#allocation3], 1
  %2655 = vsyncmov %s2654
  %s2656 = vpop.sfrf %2655
  %p2657 = scmp.eq.s32.totalorder %s2656, 0
  %p2658 = pneg %p2657
  %2660 = shalt.err (%p2658)

</llo_original>
